<compile_context>
chip_gen: v6e
topology: v6e:2x2x1
jax: 0.10.0
libtpu: 0.0.40
codegen_flags: <defaults>
</compile_context>

<pallas_src>
import functools

import jax
import jax.numpy as jnp
from jax import lax
from jax.experimental import pallas as pl
from jax.experimental.pallas import tpu as pltpu

LN_EPS = 1e-5


def _layer_norm(x, gamma, beta):
    mean = jnp.mean(x, axis=-1, keepdims=True)
    var = jnp.mean(jnp.square(x - mean), axis=-1, keepdims=True)
    return (x - mean) * lax.rsqrt(var + LN_EPS) * gamma + beta


# --------------- fused transformer-block kernel (one batch / step) ---------------

def transformer_block_kernel(x_ref, wqkv_ref, wo_ref, bo_ref, g1_ref, be1_ref,
                             w1_ref, bf1_ref, w2_ref, bf2_ref, g2_ref, be2_ref,
                             o_ref, *, nhead, dim_head, scale):
    x = x_ref[...]                                               # (N, D)
    inner = nhead * dim_head

    # ---- fused QKV projection: one MXU matmul, columns = q-heads|k-heads|v-heads ----
    qkv = jnp.dot(x, wqkv_ref[...],
                  preferred_element_type=jnp.float32)            # (N, 3*inner)

    # ---- per-head attention, merged straight back to the (N, h*d) layout ----
    ctx_heads = []
    for h in range(nhead):                                       # static unroll, H small
        lo = h * dim_head
        qh = qkv[:, lo:lo + dim_head] * scale                    # scale on q, not on scores
        kh = qkv[:, inner + lo:inner + lo + dim_head]
        vh = qkv[:, 2 * inner + lo:2 * inner + lo + dim_head]
        # q k^T: contract the last dims directly (no k^T materialization).
        s = lax.dot_general(qh, kh, (((1,), (1,)), ((), ())),
                            preferred_element_type=jnp.float32)  # (N, N)
        m = jnp.max(s, axis=-1, keepdims=True)
        e = jnp.exp(s - m)
        l = jnp.sum(e, axis=-1, keepdims=True)
        ctx_h = jnp.dot(e, vh, preferred_element_type=jnp.float32)  # (N, dh)
        # deferred softmax normalization on the (N, dh) context; EUP reciprocal.
        ctx_heads.append(ctx_h * pl.reciprocal(l, approx=True))
    ctx = jnp.concatenate(ctx_heads, axis=-1)                    # (N, inner), lane-dense

    # ---- attention out-projection (+bias), LayerNorm1, +residual ----
    attn = jnp.dot(ctx, wo_ref[...],
                   preferred_element_type=jnp.float32) + bo_ref[...]
    x1 = _layer_norm(attn, g1_ref[...], be1_ref[...]) + x

    # ---- FeedForward: Linear -> ReLU -> Linear -> ReLU  (dropout p=0 omitted) ----
    hdn = jnp.dot(x1, w1_ref[...],
                  preferred_element_type=jnp.float32) + bf1_ref[...]
    hdn = jnp.maximum(hdn, 0.0)
    hdn = jnp.dot(hdn, w2_ref[...],
                  preferred_element_type=jnp.float32) + bf2_ref[...]
    hdn = jnp.maximum(hdn, 0.0)

    # ---- LayerNorm2 + residual ----
    out = _layer_norm(hdn, g2_ref[...], be2_ref[...]) + x1
    o_ref[...] = out.astype(o_ref.dtype)


def transformer_forward(x, params, *, nhead, dim_head):
    B, N, D = x.shape
    inner = nhead * dim_head
    F = params['w1'].shape[1]
    scale = float(dim_head) ** -0.5

    kernel = functools.partial(transformer_block_kernel,
                               nhead=nhead, dim_head=dim_head, scale=scale)

    def full(shape):
        n = len(shape)
        return pl.BlockSpec(shape, lambda b, _n=n: (0,) * _n)

    per_batch = pl.BlockSpec((None, N, D), lambda b: (b, 0, 0))

    # VMEM footprint estimate (f32): weights (double-buffered by the pipeline)
    # plus per-step activations / attention intermediates.  Only raise the
    # scoped limit when the defaults (32 MiB) would not be enough.
    wbytes = 4 * (D * 3 * inner + inner * D + D * F + F * D + 6 * D + F)
    abytes = 4 * (N * 3 * inner + 3 * N * N + 2 * N * inner + N * F + 4 * N * D)
    est = 2 * wbytes + 2 * 2 * N * D * 4 + abytes
    vmem_limit = None
    if est > (24 << 20):
        vmem_limit = min(int(est * 1.5), 112 << 20)

    return pl.pallas_call(
        kernel,
        out_shape=jax.ShapeDtypeStruct((B, N, D), x.dtype),
        grid_spec=pltpu.PrefetchScalarGridSpec(
            num_scalar_prefetch=0,
            grid=(B,),
            in_specs=[per_batch,
                      full((D, 3 * inner)),
                      full((inner, D)), full((1, D)),
                      full((1, D)), full((1, D)),
                      full((D, F)), full((1, F)),
                      full((F, D)), full((1, D)),
                      full((1, D)), full((1, D))],
            out_specs=per_batch,
        ),
        compiler_params=pltpu.CompilerParams(
            dimension_semantics=("parallel",),
            vmem_limit_bytes=vmem_limit),
    )(x, params['wqkv'],
      params['wo'], params['bo'],
      params['ln1_g'], params['ln1_b'],
      params['w1'], params['b1'],
      params['w2'], params['b2'],
      params['ln2_g'], params['ln2_b'])


# ---------------- plain-JAX reference (PyTorch semantics) ----------------

def transformer_ref(x, params, *, nhead, dim_head):
    B, N, D = x.shape
    H, dh = nhead, dim_head
    inner = H * dh
    scale = float(dim_head) ** -0.5

    def ln(t, g, b):
        mu = jnp.mean(t, axis=-1, keepdims=True)
        var = jnp.mean(jnp.square(t - mu), axis=-1, keepdims=True)
        return (t - mu) * lax.rsqrt(var + LN_EPS) * g + b

    qkv = x @ params['wqkv']
    q, k, v = jnp.split(qkv, 3, axis=-1)

    def split_heads(t):  # 'b n (h d) -> b h n d'
        return t.reshape(B, N, H, dh).transpose(0, 2, 1, 3)

    qh, kh, vh = map(split_heads, (q, k, v))
    dots = jnp.einsum('bhid,bhjd->bhij', qh, kh) * scale
    attn = jax.nn.softmax(dots, axis=-1)
    ctx = jnp.einsum('bhij,bhjd->bhid', attn, vh)
    ctx = ctx.transpose(0, 2, 1, 3).reshape(B, N, inner)          # 'b h n d -> b n (h d)'
    attn_out = ctx @ params['wo'] + params['bo'][0]

    x1 = ln(attn_out, params['ln1_g'][0], params['ln1_b'][0]) + x
    h = jax.nn.relu(x1 @ params['w1'] + params['b1'][0])
    h = jax.nn.relu(h @ params['w2'] + params['b2'][0])
    return ln(h, params['ln2_g'][0], params['ln2_b'][0]) + x1


if __name__ == "__main__":
    # Small shapes consistent with the module (scaled-down ViT defaults).
    B, N = 2, 8
    patch_dim, nhead, dim_head = 32, 4, 8
    dim_feedforward = 64
    inner = nhead * dim_head

    key = jax.random.PRNGKey(0)
    ks = jax.random.split(key, 12)

    x = jax.random.normal(ks[0], (B, N, patch_dim), dtype=jnp.float32)

    # Deterministic parameter init; Linear weights stored (in, out).
    params = dict(
        wqkv=0.05 * jax.random.normal(ks[1], (patch_dim, 3 * inner), jnp.float32),
        wo=0.05 * jax.random.normal(ks[2], (inner, patch_dim), jnp.float32),
        bo=0.05 * jax.random.normal(ks[3], (1, patch_dim), jnp.float32),
        ln1_g=1.0 + 0.1 * jax.random.normal(ks[4], (1, patch_dim), jnp.float32),
        ln1_b=0.05 * jax.random.normal(ks[5], (1, patch_dim), jnp.float32),
        w1=0.05 * jax.random.normal(ks[6], (patch_dim, dim_feedforward), jnp.float32),
        b1=0.05 * jax.random.normal(ks[7], (1, dim_feedforward), jnp.float32),
        w2=0.05 * jax.random.normal(ks[8], (dim_feedforward, patch_dim), jnp.float32),
        b2=0.05 * jax.random.normal(ks[9], (1, patch_dim), jnp.float32),
        ln2_g=1.0 + 0.1 * jax.random.normal(ks[10], (1, patch_dim), jnp.float32),
        ln2_b=0.05 * jax.random.normal(ks[11], (1, patch_dim), jnp.float32),
    )

    fwd = jax.jit(functools.partial(transformer_forward,
                                    nhead=nhead, dim_head=dim_head))
    out = jax.block_until_ready(fwd(x, params))

    ref = transformer_ref(x, params, nhead=nhead, dim_head=dim_head)
    # Tolerance covers MXU accumulation order + the EUP approximate reciprocal
    # in the deferred softmax normalization, amplified by the two LayerNorms.
    assert out.shape == ref.shape
    assert jnp.allclose(out, ref, rtol=5e-3, atol=5e-3), "mismatch vs reference"

    print("KERNEL_OK")
</pallas_src>

<mosaic_0001>
module attributes {stable_mosaic.version = 11 : i64} {
  func.func @transformer_block_kernel(%arg0: i32, %arg1: memref<1x8x32xf32, #tpu.memory_space<vmem>>, %arg2: memref<32x96xf32, #tpu.memory_space<vmem>>, %arg3: memref<32x32xf32, #tpu.memory_space<vmem>>, %arg4: memref<1x32xf32, #tpu.memory_space<vmem>>, %arg5: memref<1x32xf32, #tpu.memory_space<vmem>>, %arg6: memref<1x32xf32, #tpu.memory_space<vmem>>, %arg7: memref<32x64xf32, #tpu.memory_space<vmem>>, %arg8: memref<1x64xf32, #tpu.memory_space<vmem>>, %arg9: memref<64x32xf32, #tpu.memory_space<vmem>>, %arg10: memref<1x32xf32, #tpu.memory_space<vmem>>, %arg11: memref<1x32xf32, #tpu.memory_space<vmem>>, %arg12: memref<1x32xf32, #tpu.memory_space<vmem>>, %arg13: memref<1x8x32xf32, #tpu.memory_space<vmem>>) attributes {dimension_semantics = [#tpu.dimension_semantics<parallel>], iteration_bounds = array<i64: 2>, scalar_prefetch = 0 : i64, scratch_operands = 0 : i64, tpu.core_type = #tpu.core_type<tc>, window_params = [{transform_indices = @transform_0, window_bounds = array<i64: 1, 8, 32>}, {pipeline_mode = #tpu.pipeline_mode<synchronous>, transform_indices = @transform_1, window_bounds = array<i64: 32, 96>}, {pipeline_mode = #tpu.pipeline_mode<synchronous>, transform_indices = @transform_2, window_bounds = array<i64: 32, 32>}, {pipeline_mode = #tpu.pipeline_mode<synchronous>, transform_indices = @transform_3, window_bounds = array<i64: 1, 32>}, {pipeline_mode = #tpu.pipeline_mode<synchronous>, transform_indices = @transform_4, window_bounds = array<i64: 1, 32>}, {pipeline_mode = #tpu.pipeline_mode<synchronous>, transform_indices = @transform_5, window_bounds = array<i64: 1, 32>}, {pipeline_mode = #tpu.pipeline_mode<synchronous>, transform_indices = @transform_6, window_bounds = array<i64: 32, 64>}, {pipeline_mode = #tpu.pipeline_mode<synchronous>, transform_indices = @transform_7, window_bounds = array<i64: 1, 64>}, {pipeline_mode = #tpu.pipeline_mode<synchronous>, transform_indices = @transform_8, window_bounds = array<i64: 64, 32>}, {pipeline_mode = #tpu.pipeline_mode<synchronous>, transform_indices = @transform_9, window_bounds = array<i64: 1, 32>}, {pipeline_mode = #tpu.pipeline_mode<synchronous>, transform_indices = @transform_10, window_bounds = array<i64: 1, 32>}, {pipeline_mode = #tpu.pipeline_mode<synchronous>, transform_indices = @transform_11, window_bounds = array<i64: 1, 32>}, {transform_indices = @transform_12, window_bounds = array<i64: 1, 8, 32>}]} {
    %c0 = arith.constant 0 : index
    %c0_0 = arith.constant 0 : index
    %c0_1 = arith.constant 0 : index
    %0 = vector.load %arg1[%c0, %c0_0, %c0_1] : memref<1x8x32xf32, #tpu.memory_space<vmem>>, vector<1x8x32xf32>
    %1 = vector.shape_cast %0 : vector<1x8x32xf32> to vector<8x32xf32>
    %c0_2 = arith.constant 0 : index
    %c0_3 = arith.constant 0 : index
    %2 = vector.load %arg2[%c0_2, %c0_3] : memref<32x96xf32, #tpu.memory_space<vmem>>, vector<32x96xf32>
    %cst = arith.constant dense<0.000000e+00> : vector<8x96xf32>
    %3 = tpu.matmul %1, %2, %cst {dimension_numbers = #tpu.dot_dimension_numbers<[1], [0], [0], [1], [0, 0, 1, 1], [], []>} : vector<8x32xf32>, vector<32x96xf32>, vector<8x96xf32> -> vector<8x96xf32>
    %4 = vector.extract_strided_slice %3 {offsets = [0, 0], sizes = [8, 8], strides = [1, 1]} : vector<8x96xf32> to vector<8x8xf32>
    %cst_4 = arith.constant 0.353553385 : f32
    %5 = vector.broadcast %cst_4 : f32 to vector<8x8xf32>
    %6 = arith.mulf %4, %5 : vector<8x8xf32>
    %7 = vector.extract_strided_slice %3 {offsets = [0, 32], sizes = [8, 8], strides = [1, 1]} : vector<8x96xf32> to vector<8x8xf32>
    %8 = vector.extract_strided_slice %3 {offsets = [0, 64], sizes = [8, 8], strides = [1, 1]} : vector<8x96xf32> to vector<8x8xf32>
    %cst_5 = arith.constant dense<0.000000e+00> : vector<8x8xf32>
    %9 = tpu.matmul %6, %7, %cst_5 {dimension_numbers = #tpu.dot_dimension_numbers<[1], [1], [0], [0], [0, 0, 1, 0], [], []>} : vector<8x8xf32>, vector<8x8xf32>, vector<8x8xf32> -> vector<8x8xf32>
    %cst_6 = arith.constant dense<0xFF800000> : vector<8xf32>
    %10 = vector.multi_reduction <maximumf>, %9, %cst_6 [1] : vector<8x8xf32> to vector<8xf32>
    %11 = vector.shape_cast %10 : vector<8xf32> to vector<8x1xf32>
    %12 = vector.broadcast %11 : vector<8x1xf32> to vector<8x8xf32>
    %13 = arith.subf %9, %12 : vector<8x8xf32>
    %14 = math.exp %13 : vector<8x8xf32>
    %cst_7 = arith.constant dense<0.000000e+00> : vector<8xf32>
    %15 = vector.multi_reduction <add>, %14, %cst_7 [1] : vector<8x8xf32> to vector<8xf32>
    %16 = vector.shape_cast %15 : vector<8xf32> to vector<8x1xf32>
    %cst_8 = arith.constant dense<0.000000e+00> : vector<8x8xf32>
    %17 = tpu.matmul %14, %8, %cst_8 {dimension_numbers = #tpu.dot_dimension_numbers<[1], [0], [0], [1], [0, 0, 1, 1], [], []>} : vector<8x8xf32>, vector<8x8xf32>, vector<8x8xf32> -> vector<8x8xf32>
    %18 = tpu.reciprocal %16 {approx = true} : vector<8x1xf32> -> vector<8x1xf32>
    %19 = vector.broadcast %18 : vector<8x1xf32> to vector<8x8xf32>
    %20 = arith.mulf %17, %19 : vector<8x8xf32>
    %21 = vector.extract_strided_slice %3 {offsets = [0, 8], sizes = [8, 8], strides = [1, 1]} : vector<8x96xf32> to vector<8x8xf32>
    %cst_9 = arith.constant 0.353553385 : f32
    %22 = vector.broadcast %cst_9 : f32 to vector<8x8xf32>
    %23 = arith.mulf %21, %22 : vector<8x8xf32>
    %24 = vector.extract_strided_slice %3 {offsets = [0, 40], sizes = [8, 8], strides = [1, 1]} : vector<8x96xf32> to vector<8x8xf32>
    %25 = vector.extract_strided_slice %3 {offsets = [0, 72], sizes = [8, 8], strides = [1, 1]} : vector<8x96xf32> to vector<8x8xf32>
    %cst_10 = arith.constant dense<0.000000e+00> : vector<8x8xf32>
    %26 = tpu.matmul %23, %24, %cst_10 {dimension_numbers = #tpu.dot_dimension_numbers<[1], [1], [0], [0], [0, 0, 1, 0], [], []>} : vector<8x8xf32>, vector<8x8xf32>, vector<8x8xf32> -> vector<8x8xf32>
    %cst_11 = arith.constant dense<0xFF800000> : vector<8xf32>
    %27 = vector.multi_reduction <maximumf>, %26, %cst_11 [1] : vector<8x8xf32> to vector<8xf32>
    %28 = vector.shape_cast %27 : vector<8xf32> to vector<8x1xf32>
    %29 = vector.broadcast %28 : vector<8x1xf32> to vector<8x8xf32>
    %30 = arith.subf %26, %29 : vector<8x8xf32>
    %31 = math.exp %30 : vector<8x8xf32>
    %cst_12 = arith.constant dense<0.000000e+00> : vector<8xf32>
    %32 = vector.multi_reduction <add>, %31, %cst_12 [1] : vector<8x8xf32> to vector<8xf32>
    %33 = vector.shape_cast %32 : vector<8xf32> to vector<8x1xf32>
    %cst_13 = arith.constant dense<0.000000e+00> : vector<8x8xf32>
    %34 = tpu.matmul %31, %25, %cst_13 {dimension_numbers = #tpu.dot_dimension_numbers<[1], [0], [0], [1], [0, 0, 1, 1], [], []>} : vector<8x8xf32>, vector<8x8xf32>, vector<8x8xf32> -> vector<8x8xf32>
    %35 = tpu.reciprocal %33 {approx = true} : vector<8x1xf32> -> vector<8x1xf32>
    %36 = vector.broadcast %35 : vector<8x1xf32> to vector<8x8xf32>
    %37 = arith.mulf %34, %36 : vector<8x8xf32>
    %38 = vector.extract_strided_slice %3 {offsets = [0, 16], sizes = [8, 8], strides = [1, 1]} : vector<8x96xf32> to vector<8x8xf32>
    %cst_14 = arith.constant 0.353553385 : f32
    %39 = vector.broadcast %cst_14 : f32 to vector<8x8xf32>
    %40 = arith.mulf %38, %39 : vector<8x8xf32>
    %41 = vector.extract_strided_slice %3 {offsets = [0, 48], sizes = [8, 8], strides = [1, 1]} : vector<8x96xf32> to vector<8x8xf32>
    %42 = vector.extract_strided_slice %3 {offsets = [0, 80], sizes = [8, 8], strides = [1, 1]} : vector<8x96xf32> to vector<8x8xf32>
    %cst_15 = arith.constant dense<0.000000e+00> : vector<8x8xf32>
    %43 = tpu.matmul %40, %41, %cst_15 {dimension_numbers = #tpu.dot_dimension_numbers<[1], [1], [0], [0], [0, 0, 1, 0], [], []>} : vector<8x8xf32>, vector<8x8xf32>, vector<8x8xf32> -> vector<8x8xf32>
    %cst_16 = arith.constant dense<0xFF800000> : vector<8xf32>
    %44 = vector.multi_reduction <maximumf>, %43, %cst_16 [1] : vector<8x8xf32> to vector<8xf32>
    %45 = vector.shape_cast %44 : vector<8xf32> to vector<8x1xf32>
    %46 = vector.broadcast %45 : vector<8x1xf32> to vector<8x8xf32>
    %47 = arith.subf %43, %46 : vector<8x8xf32>
    %48 = math.exp %47 : vector<8x8xf32>
    %cst_17 = arith.constant dense<0.000000e+00> : vector<8xf32>
    %49 = vector.multi_reduction <add>, %48, %cst_17 [1] : vector<8x8xf32> to vector<8xf32>
    %50 = vector.shape_cast %49 : vector<8xf32> to vector<8x1xf32>
    %cst_18 = arith.constant dense<0.000000e+00> : vector<8x8xf32>
    %51 = tpu.matmul %48, %42, %cst_18 {dimension_numbers = #tpu.dot_dimension_numbers<[1], [0], [0], [1], [0, 0, 1, 1], [], []>} : vector<8x8xf32>, vector<8x8xf32>, vector<8x8xf32> -> vector<8x8xf32>
    %52 = tpu.reciprocal %50 {approx = true} : vector<8x1xf32> -> vector<8x1xf32>
    %53 = vector.broadcast %52 : vector<8x1xf32> to vector<8x8xf32>
    %54 = arith.mulf %51, %53 : vector<8x8xf32>
    %55 = vector.extract_strided_slice %3 {offsets = [0, 24], sizes = [8, 8], strides = [1, 1]} : vector<8x96xf32> to vector<8x8xf32>
    %cst_19 = arith.constant 0.353553385 : f32
    %56 = vector.broadcast %cst_19 : f32 to vector<8x8xf32>
    %57 = arith.mulf %55, %56 : vector<8x8xf32>
    %58 = vector.extract_strided_slice %3 {offsets = [0, 56], sizes = [8, 8], strides = [1, 1]} : vector<8x96xf32> to vector<8x8xf32>
    %59 = vector.extract_strided_slice %3 {offsets = [0, 88], sizes = [8, 8], strides = [1, 1]} : vector<8x96xf32> to vector<8x8xf32>
    %cst_20 = arith.constant dense<0.000000e+00> : vector<8x8xf32>
    %60 = tpu.matmul %57, %58, %cst_20 {dimension_numbers = #tpu.dot_dimension_numbers<[1], [1], [0], [0], [0, 0, 1, 0], [], []>} : vector<8x8xf32>, vector<8x8xf32>, vector<8x8xf32> -> vector<8x8xf32>
    %cst_21 = arith.constant dense<0xFF800000> : vector<8xf32>
    %61 = vector.multi_reduction <maximumf>, %60, %cst_21 [1] : vector<8x8xf32> to vector<8xf32>
    %62 = vector.shape_cast %61 : vector<8xf32> to vector<8x1xf32>
    %63 = vector.broadcast %62 : vector<8x1xf32> to vector<8x8xf32>
    %64 = arith.subf %60, %63 : vector<8x8xf32>
    %65 = math.exp %64 : vector<8x8xf32>
    %cst_22 = arith.constant dense<0.000000e+00> : vector<8xf32>
    %66 = vector.multi_reduction <add>, %65, %cst_22 [1] : vector<8x8xf32> to vector<8xf32>
    %67 = vector.shape_cast %66 : vector<8xf32> to vector<8x1xf32>
    %cst_23 = arith.constant dense<0.000000e+00> : vector<8x8xf32>
    %68 = tpu.matmul %65, %59, %cst_23 {dimension_numbers = #tpu.dot_dimension_numbers<[1], [0], [0], [1], [0, 0, 1, 1], [], []>} : vector<8x8xf32>, vector<8x8xf32>, vector<8x8xf32> -> vector<8x8xf32>
    %69 = tpu.reciprocal %67 {approx = true} : vector<8x1xf32> -> vector<8x1xf32>
    %70 = vector.broadcast %69 : vector<8x1xf32> to vector<8x8xf32>
    %71 = arith.mulf %68, %70 : vector<8x8xf32>
    %72 = tpu.concatenate %20, %37, %54, %71 in 1 : vector<8x8xf32>, vector<8x8xf32>, vector<8x8xf32>, vector<8x8xf32> -> vector<8x32xf32>
    %c0_24 = arith.constant 0 : index
    %c0_25 = arith.constant 0 : index
    %73 = vector.load %arg3[%c0_24, %c0_25] : memref<32x32xf32, #tpu.memory_space<vmem>>, vector<32x32xf32>
    %cst_26 = arith.constant dense<0.000000e+00> : vector<8x32xf32>
    %74 = tpu.matmul %72, %73, %cst_26 {dimension_numbers = #tpu.dot_dimension_numbers<[1], [0], [0], [1], [0, 0, 1, 1], [], []>} : vector<8x32xf32>, vector<32x32xf32>, vector<8x32xf32> -> vector<8x32xf32>
    %c0_27 = arith.constant 0 : index
    %c0_28 = arith.constant 0 : index
    %75 = vector.load %arg4[%c0_27, %c0_28] : memref<1x32xf32, #tpu.memory_space<vmem>>, vector<1x32xf32>
    %76 = vector.broadcast %75 : vector<1x32xf32> to vector<8x32xf32>
    %77 = arith.addf %74, %76 : vector<8x32xf32>
    %c0_29 = arith.constant 0 : index
    %c0_30 = arith.constant 0 : index
    %78 = vector.load %arg5[%c0_29, %c0_30] : memref<1x32xf32, #tpu.memory_space<vmem>>, vector<1x32xf32>
    %c0_31 = arith.constant 0 : index
    %c0_32 = arith.constant 0 : index
    %79 = vector.load %arg6[%c0_31, %c0_32] : memref<1x32xf32, #tpu.memory_space<vmem>>, vector<1x32xf32>
    %cst_33 = arith.constant dense<0.000000e+00> : vector<8xf32>
    %80 = vector.multi_reduction <add>, %77, %cst_33 [1] : vector<8x32xf32> to vector<8xf32>
    %81 = vector.shape_cast %80 : vector<8xf32> to vector<8x1xf32>
    %cst_34 = arith.constant 3.200000e+01 : f32
    %82 = vector.broadcast %cst_34 : f32 to vector<8x1xf32>
    %83 = arith.divf %81, %82 : vector<8x1xf32>
    %84 = vector.broadcast %83 : vector<8x1xf32> to vector<8x32xf32>
    %85 = arith.subf %77, %84 : vector<8x32xf32>
    %86 = arith.mulf %85, %85 : vector<8x32xf32>
    %cst_35 = arith.constant dense<0.000000e+00> : vector<8xf32>
    %87 = vector.multi_reduction <add>, %86, %cst_35 [1] : vector<8x32xf32> to vector<8xf32>
    %88 = vector.shape_cast %87 : vector<8xf32> to vector<8x1xf32>
    %cst_36 = arith.constant 3.200000e+01 : f32
    %89 = vector.broadcast %cst_36 : f32 to vector<8x1xf32>
    %90 = arith.divf %88, %89 : vector<8x1xf32>
    %91 = vector.broadcast %83 : vector<8x1xf32> to vector<8x32xf32>
    %92 = arith.subf %77, %91 : vector<8x32xf32>
    %cst_37 = arith.constant 9.99999974E-6 : f32
    %93 = vector.broadcast %cst_37 : f32 to vector<8x1xf32>
    %94 = arith.addf %90, %93 : vector<8x1xf32>
    %95 = math.rsqrt %94 : vector<8x1xf32>
    %96 = vector.broadcast %95 : vector<8x1xf32> to vector<8x32xf32>
    %97 = arith.mulf %92, %96 : vector<8x32xf32>
    %98 = vector.broadcast %78 : vector<1x32xf32> to vector<8x32xf32>
    %99 = arith.mulf %97, %98 : vector<8x32xf32>
    %100 = vector.broadcast %79 : vector<1x32xf32> to vector<8x32xf32>
    %101 = arith.addf %99, %100 : vector<8x32xf32>
    %102 = arith.addf %101, %1 : vector<8x32xf32>
    %c0_38 = arith.constant 0 : index
    %c0_39 = arith.constant 0 : index
    %103 = vector.load %arg7[%c0_38, %c0_39] : memref<32x64xf32, #tpu.memory_space<vmem>>, vector<32x64xf32>
    %cst_40 = arith.constant dense<0.000000e+00> : vector<8x64xf32>
    %104 = tpu.matmul %102, %103, %cst_40 {dimension_numbers = #tpu.dot_dimension_numbers<[1], [0], [0], [1], [0, 0, 1, 1], [], []>} : vector<8x32xf32>, vector<32x64xf32>, vector<8x64xf32> -> vector<8x64xf32>
    %c0_41 = arith.constant 0 : index
    %c0_42 = arith.constant 0 : index
    %105 = vector.load %arg8[%c0_41, %c0_42] : memref<1x64xf32, #tpu.memory_space<vmem>>, vector<1x64xf32>
    %106 = vector.broadcast %105 : vector<1x64xf32> to vector<8x64xf32>
    %107 = arith.addf %104, %106 : vector<8x64xf32>
    %cst_43 = arith.constant 0.000000e+00 : f32
    %108 = vector.broadcast %cst_43 : f32 to vector<8x64xf32>
    %109 = arith.maximumf %107, %108 : vector<8x64xf32>
    %c0_44 = arith.constant 0 : index
    %c0_45 = arith.constant 0 : index
    %110 = vector.load %arg9[%c0_44, %c0_45] : memref<64x32xf32, #tpu.memory_space<vmem>>, vector<64x32xf32>
    %cst_46 = arith.constant dense<0.000000e+00> : vector<8x32xf32>
    %111 = tpu.matmul %109, %110, %cst_46 {dimension_numbers = #tpu.dot_dimension_numbers<[1], [0], [0], [1], [0, 0, 1, 1], [], []>} : vector<8x64xf32>, vector<64x32xf32>, vector<8x32xf32> -> vector<8x32xf32>
    %c0_47 = arith.constant 0 : index
    %c0_48 = arith.constant 0 : index
    %112 = vector.load %arg10[%c0_47, %c0_48] : memref<1x32xf32, #tpu.memory_space<vmem>>, vector<1x32xf32>
    %113 = vector.broadcast %112 : vector<1x32xf32> to vector<8x32xf32>
    %114 = arith.addf %111, %113 : vector<8x32xf32>
    %cst_49 = arith.constant 0.000000e+00 : f32
    %115 = vector.broadcast %cst_49 : f32 to vector<8x32xf32>
    %116 = arith.maximumf %114, %115 : vector<8x32xf32>
    %c0_50 = arith.constant 0 : index
    %c0_51 = arith.constant 0 : index
    %117 = vector.load %arg11[%c0_50, %c0_51] : memref<1x32xf32, #tpu.memory_space<vmem>>, vector<1x32xf32>
    %c0_52 = arith.constant 0 : index
    %c0_53 = arith.constant 0 : index
    %118 = vector.load %arg12[%c0_52, %c0_53] : memref<1x32xf32, #tpu.memory_space<vmem>>, vector<1x32xf32>
    %cst_54 = arith.constant dense<0.000000e+00> : vector<8xf32>
    %119 = vector.multi_reduction <add>, %116, %cst_54 [1] : vector<8x32xf32> to vector<8xf32>
    %120 = vector.shape_cast %119 : vector<8xf32> to vector<8x1xf32>
    %cst_55 = arith.constant 3.200000e+01 : f32
    %121 = vector.broadcast %cst_55 : f32 to vector<8x1xf32>
    %122 = arith.divf %120, %121 : vector<8x1xf32>
    %123 = vector.broadcast %122 : vector<8x1xf32> to vector<8x32xf32>
    %124 = arith.subf %116, %123 : vector<8x32xf32>
    %125 = arith.mulf %124, %124 : vector<8x32xf32>
    %cst_56 = arith.constant dense<0.000000e+00> : vector<8xf32>
    %126 = vector.multi_reduction <add>, %125, %cst_56 [1] : vector<8x32xf32> to vector<8xf32>
    %127 = vector.shape_cast %126 : vector<8xf32> to vector<8x1xf32>
    %cst_57 = arith.constant 3.200000e+01 : f32
    %128 = vector.broadcast %cst_57 : f32 to vector<8x1xf32>
    %129 = arith.divf %127, %128 : vector<8x1xf32>
    %130 = vector.broadcast %122 : vector<8x1xf32> to vector<8x32xf32>
    %131 = arith.subf %116, %130 : vector<8x32xf32>
    %cst_58 = arith.constant 9.99999974E-6 : f32
    %132 = vector.broadcast %cst_58 : f32 to vector<8x1xf32>
    %133 = arith.addf %129, %132 : vector<8x1xf32>
    %134 = math.rsqrt %133 : vector<8x1xf32>
    %135 = vector.broadcast %134 : vector<8x1xf32> to vector<8x32xf32>
    %136 = arith.mulf %131, %135 : vector<8x32xf32>
    %137 = vector.broadcast %117 : vector<1x32xf32> to vector<8x32xf32>
    %138 = arith.mulf %136, %137 : vector<8x32xf32>
    %139 = vector.broadcast %118 : vector<1x32xf32> to vector<8x32xf32>
    %140 = arith.addf %138, %139 : vector<8x32xf32>
    %141 = arith.addf %140, %102 : vector<8x32xf32>
    %c0_59 = arith.constant 0 : index
    %c0_60 = arith.constant 0 : index
    %c0_61 = arith.constant 0 : index
    %142 = vector.load %arg13[%c0_59, %c0_60, %c0_61] : memref<1x8x32xf32, #tpu.memory_space<vmem>>, vector<1x8x32xf32>
    %143 = vector.shape_cast %142 : vector<1x8x32xf32> to vector<8x32xf32>
    %144 = vector.shape_cast %141 : vector<8x32xf32> to vector<1x8x32xf32>
    tpu.vector_store %arg13[%c0_59, %c0_60, %c0_61], %144 {strides = array<i32>} : memref<1x8x32xf32, #tpu.memory_space<vmem>>, vector<1x8x32xf32>,
    return
  }
  func.func @transform_0(%arg0: i32) -> (i32, i32, i32) {
    %c0_i32 = arith.constant 0 : i32
    %c0_i32_0 = arith.constant 0 : i32
    %c0_i32_1 = arith.constant 0 : i32
    return %arg0, %c0_i32, %c0_i32_0 : i32, i32, i32
  }
  func.func @transform_1(%arg0: i32) -> (i32, i32) {
    %c0_i32 = arith.constant 0 : i32
    %c0_i32_0 = arith.constant 0 : i32
    %c0_i32_1 = arith.constant 0 : i32
    return %c0_i32, %c0_i32_0 : i32, i32
  }
  func.func @transform_2(%arg0: i32) -> (i32, i32) {
    %c0_i32 = arith.constant 0 : i32
    %c0_i32_0 = arith.constant 0 : i32
    %c0_i32_1 = arith.constant 0 : i32
    return %c0_i32, %c0_i32_0 : i32, i32
  }
  func.func @transform_3(%arg0: i32) -> (i32, i32) {
    %c0_i32 = arith.constant 0 : i32
    %c0_i32_0 = arith.constant 0 : i32
    %c0_i32_1 = arith.constant 0 : i32
    return %c0_i32, %c0_i32_0 : i32, i32
  }
  func.func @transform_4(%arg0: i32) -> (i32, i32) {
    %c0_i32 = arith.constant 0 : i32
    %c0_i32_0 = arith.constant 0 : i32
    %c0_i32_1 = arith.constant 0 : i32
    return %c0_i32, %c0_i32_0 : i32, i32
  }
  func.func @transform_5(%arg0: i32) -> (i32, i32) {
    %c0_i32 = arith.constant 0 : i32
    %c0_i32_0 = arith.constant 0 : i32
    %c0_i32_1 = arith.constant 0 : i32
    return %c0_i32, %c0_i32_0 : i32, i32
  }
  func.func @transform_6(%arg0: i32) -> (i32, i32) {
    %c0_i32 = arith.constant 0 : i32
    %c0_i32_0 = arith.constant 0 : i32
    %c0_i32_1 = arith.constant 0 : i32
    return %c0_i32, %c0_i32_0 : i32, i32
  }
  func.func @transform_7(%arg0: i32) -> (i32, i32) {
    %c0_i32 = arith.constant 0 : i32
    %c0_i32_0 = arith.constant 0 : i32
    %c0_i32_1 = arith.constant 0 : i32
    return %c0_i32, %c0_i32_0 : i32, i32
  }
  func.func @transform_8(%arg0: i32) -> (i32, i32) {
    %c0_i32 = arith.constant 0 : i32
    %c0_i32_0 = arith.constant 0 : i32
    %c0_i32_1 = arith.constant 0 : i32
    return %c0_i32, %c0_i32_0 : i32, i32
  }
  func.func @transform_9(%arg0: i32) -> (i32, i32) {
    %c0_i32 = arith.constant 0 : i32
    %c0_i32_0 = arith.constant 0 : i32
    %c0_i32_1 = arith.constant 0 : i32
    return %c0_i32, %c0_i32_0 : i32, i32
  }
  func.func @transform_10(%arg0: i32) -> (i32, i32) {
    %c0_i32 = arith.constant 0 : i32
    %c0_i32_0 = arith.constant 0 : i32
    %c0_i32_1 = arith.constant 0 : i32
    return %c0_i32, %c0_i32_0 : i32, i32
  }
  func.func @transform_11(%arg0: i32) -> (i32, i32) {
    %c0_i32 = arith.constant 0 : i32
    %c0_i32_0 = arith.constant 0 : i32
    %c0_i32_1 = arith.constant 0 : i32
    return %c0_i32, %c0_i32_0 : i32, i32
  }
  func.func @transform_12(%arg0: i32) -> (i32, i32, i32) {
    %c0_i32 = arith.constant 0 : i32
    %c0_i32_0 = arith.constant 0 : i32
    %c0_i32_1 = arith.constant 0 : i32
    return %arg0, %c0_i32, %c0_i32_0 : i32, i32, i32
  }
}

</mosaic_0001>

<llo_original>
// kernel: transformer_forward.1
$region0: #{transformer_forward.1}
  #allocation0 [shape = 'u32[]', space=smem, size = 0x4, offset = 0x4, fixed_abs, tag = 'smem constant byte address 0x4 - core index']
  #allocation1 [shape = 'u32[144,128]{1,0:T(1,128)}', space=vmem, size = 0x12000, scoped, tag = 'internal scratch']
  %s0 = inlined_call_operand.hbm [shape: f32[2,8,32], index: 0, kind: input, shape index: {}]
  %s1 = inlined_call_operand.vmem [shape: f32[32,96], index: 1, kind: input, shape index: {}]
  %s2 = inlined_call_operand.vmem [shape: f32[32,32], index: 2, kind: input, shape index: {}]
  %s3 = inlined_call_operand.vmem [shape: f32[1,32], index: 3, kind: input, shape index: {}]
  %s4 = inlined_call_operand.vmem [shape: f32[1,32], index: 4, kind: input, shape index: {}]
  %s5 = inlined_call_operand.vmem [shape: f32[1,32], index: 5, kind: input, shape index: {}]
  %s6 = inlined_call_operand.vmem [shape: f32[32,64], index: 6, kind: input, shape index: {}]
  %s7 = inlined_call_operand.hbm [shape: f32[1,64], index: 7, kind: input, shape index: {}]
  %s8 = inlined_call_operand.vmem [shape: f32[64,32], index: 8, kind: input, shape index: {}]
  %s9 = inlined_call_operand.hbm [shape: f32[1,32], index: 9, kind: input, shape index: {}]
  %s10 = inlined_call_operand.vmem [shape: f32[1,32], index: 10, kind: input, shape index: {}]
  %s11 = inlined_call_operand.vmem [shape: f32[1,32], index: 11, kind: input, shape index: {}]
  %s12 = inlined_call_operand.hbm [shape: f32[2,8,32], index: 12, kind: output, shape index: {}]
  %s13 = sld [smem:[#allocation0]]
  $region93: #{transformer_forward.1} parent=0
    _
  %s15 = ssub.s32 1, %s13
  %s16 = scalar_select 0, %s15, %s13
  $region1: #{transformer_forward.1} parent=0
    #allocation2 [shape = 'u8[8192]{0}', space=vmem, size = 0x2000, scoped, tag = 'input window, operand 0']
    #allocation3 [shape = 's32[2]{0}', space=sflag, size = 0x8, scoped, tag = 'scoped memory for transformer_forward.1']
    #allocation4 [shape = 's32[2]{0}', space=sflag, size = 0x8, scoped, tag = 'scoped memory for transformer_forward.1']
    #allocation5 [shape = 'u8[512]{0}', space=vmem, size = 0x400, scoped, tag = 'input window, operand 7, single buffered']
    #allocation6 [shape = 's32[1]{0}', space=sflag, size = 0x4, scoped, tag = 'scoped memory for transformer_forward.1']
    #allocation7 [shape = 'u8[512]{0}', space=vmem, size = 0x400, scoped, tag = 'input window, operand 9, single buffered']
    #allocation8 [shape = 'u8[8192]{0}', space=vmem, size = 0x2000, scoped, tag = 'output window, operand 0']
    %17 = vsyncpa [#allocation3], 0
    %s18 = scalar_lea.sflag [#allocation3], 1
    %19 = vsyncpa %s18, 0
    %20 = vsyncpa [#allocation6], 0
    %21 = vsyncpa [#allocation4], 0
    %s22 = scalar_lea.sflag [#allocation4], 1
    %23 = vsyncpa %s22, 0
    loop: start=0, step=1, limit=4
    $region2: #{transformer_forward.1} parent=1 // loop_pre_header
      _
    $region3: #{transformer_forward.1} parent=1 // loop_header
      %s25 = sphi 0, %s29
      %p26 = scmp.ge.s32.totalorder %s25, 4
      %s35 = sphi 0, %s37
      %s38 = sphi 0, %s35
      %s39 = sphi 0, %s38
      %s55 = sphi 0, %s39
      %s59 = sphi 0, %s59
      %s61 = sphi 0, %s59
      %s62 = sphi 0, %s61
      %s76 = sphi 0, %s62
      %s80 = sphi 0, %s80
      %s82 = sphi 0, %s80
      %s83 = sphi 0, %s82
      %s97 = sphi 0, %s83
      %s101 = sphi 0, %s101
      %s103 = sphi 0, %s101
      %s104 = sphi 0, %s103
      %s118 = sphi 0, %s104
      %s122 = sphi 0, %s122
      %s124 = sphi 0, %s122
      %s125 = sphi 0, %s124
      %s139 = sphi 0, %s125
      %s143 = sphi 0, %s143
      %s145 = sphi 0, %s143
      %s146 = sphi 0, %s145
      %s160 = sphi 0, %s146
      %s164 = sphi 0, %s164
      %s166 = sphi 0, %s164
      %s167 = sphi 0, %s166
      %s181 = sphi 0, %s167
      %s185 = sphi 0, %s185
      %s187 = sphi 0, %s185
      %s188 = sphi 0, %s187
      %s202 = sphi 0, %s188
      %s206 = sphi 0, %s206
      %s208 = sphi 0, %s206
      %s209 = sphi 0, %s208
      %s223 = sphi 0, %s209
      %s227 = sphi 0, %s227
      %s229 = sphi 0, %s227
      %s230 = sphi 0, %s229
      %s244 = sphi 0, %s230
      %s248 = sphi 0, %s248
      %s250 = sphi 0, %s248
      %s251 = sphi 0, %s250
      %s265 = sphi 0, %s251
      %s269 = sphi 0, %s269
      %s271 = sphi 0, %s269
      %s272 = sphi 0, %s271
      %s286 = sphi 0, %s272
      %s292 = sphi 0, %s294
      %s295 = sphi 0, %s292
      %s296 = sphi 0, %s295
      %s312 = sphi 0, %s296
    $region4: #{transformer_forward.1} parent=1 // loop_header_branch
      %28 = sbr.rel (%p26) target = $region8
    $region5: #{transformer_forward.1} parent=1 // loop_body
      %s30 = ssub.s32 %s25, 1
      %s31 = ssub.s32 %s25, 2
      %s32 = sadd.s32 %s25, 1
      %s33 = ssub.s32 %s25, %s32
      %p34 = scmp.eq.s32.totalorder %s33, 0
      %s36 = sadd.s32 %s35, 1
      %s37 = scalar_select %p34, %s35, %s36
      %p40 = pneg %p34
      %p41 = scmp.eq.s32.totalorder %s25, 1
      %p42 = por %p40, %p41
      %p43 = scmp.ne.s32.totalorder %s35, %s38
      %p44 = scmp.eq.s32.totalorder %s25, 0
      %p45 = por %p43, %p44
      %p46 = scmp.ne.s32.totalorder %s35, %s38
      %p47 = scmp.eq.s32.totalorder %s30, 1
      %p48 = por %p46, %p47
      %p49 = scmp.ne.s32.totalorder %s38, %s39
      %p50 = scmp.eq.s32.totalorder %s30, 0
      %p51 = por %p49, %p50
      %p52 = scmp.ne.s32.totalorder %s38, %s39
      %p53 = scmp.eq.s32.totalorder %s31, 1
      %p54 = por %p52, %p53
      %p56 = scmp.ne.s32.totalorder %s39, %s55
      %p57 = scmp.eq.s32.totalorder %s31, 0
      %p58 = por %p56, %p57
      %s60 = sadd.s32 %s59, 1
      %p63 = scmp.eq.s32.totalorder %s25, 1
      %p64 = scmp.ne.s32.totalorder %s59, %s61
      %p65 = scmp.eq.s32.totalorder %s25, 0
      %p66 = por %p64, %p65
      %p67 = scmp.ne.s32.totalorder %s59, %s61
      %p68 = scmp.eq.s32.totalorder %s30, 1
      %p69 = por %p67, %p68
      %p70 = scmp.ne.s32.totalorder %s61, %s62
      %p71 = scmp.eq.s32.totalorder %s30, 0
      %p72 = por %p70, %p71
      %p73 = scmp.ne.s32.totalorder %s61, %s62
      %p74 = scmp.eq.s32.totalorder %s31, 1
      %p75 = por %p73, %p74
      %p77 = scmp.ne.s32.totalorder %s62, %s76
      %p78 = scmp.eq.s32.totalorder %s31, 0
      %p79 = por %p77, %p78
      %s81 = sadd.s32 %s80, 1
      %p84 = scmp.eq.s32.totalorder %s25, 1
      %p85 = scmp.ne.s32.totalorder %s80, %s82
      %p86 = scmp.eq.s32.totalorder %s25, 0
      %p87 = por %p85, %p86
      %p88 = scmp.ne.s32.totalorder %s80, %s82
      %p89 = scmp.eq.s32.totalorder %s30, 1
      %p90 = por %p88, %p89
      %p91 = scmp.ne.s32.totalorder %s82, %s83
      %p92 = scmp.eq.s32.totalorder %s30, 0
      %p93 = por %p91, %p92
      %p94 = scmp.ne.s32.totalorder %s82, %s83
      %p95 = scmp.eq.s32.totalorder %s31, 1
      %p96 = por %p94, %p95
      %p98 = scmp.ne.s32.totalorder %s83, %s97
      %p99 = scmp.eq.s32.totalorder %s31, 0
      %p100 = por %p98, %p99
      %s102 = sadd.s32 %s101, 1
      %p105 = scmp.eq.s32.totalorder %s25, 1
      %p106 = scmp.ne.s32.totalorder %s101, %s103
      %p107 = scmp.eq.s32.totalorder %s25, 0
      %p108 = por %p106, %p107
      %p109 = scmp.ne.s32.totalorder %s101, %s103
      %p110 = scmp.eq.s32.totalorder %s30, 1
      %p111 = por %p109, %p110
      %p112 = scmp.ne.s32.totalorder %s103, %s104
      %p113 = scmp.eq.s32.totalorder %s30, 0
      %p114 = por %p112, %p113
      %p115 = scmp.ne.s32.totalorder %s103, %s104
      %p116 = scmp.eq.s32.totalorder %s31, 1
      %p117 = por %p115, %p116
      %p119 = scmp.ne.s32.totalorder %s104, %s118
      %p120 = scmp.eq.s32.totalorder %s31, 0
      %p121 = por %p119, %p120
      %s123 = sadd.s32 %s122, 1
      %p126 = scmp.eq.s32.totalorder %s25, 1
      %p127 = scmp.ne.s32.totalorder %s122, %s124
      %p128 = scmp.eq.s32.totalorder %s25, 0
      %p129 = por %p127, %p128
      %p130 = scmp.ne.s32.totalorder %s122, %s124
      %p131 = scmp.eq.s32.totalorder %s30, 1
      %p132 = por %p130, %p131
      %p133 = scmp.ne.s32.totalorder %s124, %s125
      %p134 = scmp.eq.s32.totalorder %s30, 0
      %p135 = por %p133, %p134
      %p136 = scmp.ne.s32.totalorder %s124, %s125
      %p137 = scmp.eq.s32.totalorder %s31, 1
      %p138 = por %p136, %p137
      %p140 = scmp.ne.s32.totalorder %s125, %s139
      %p141 = scmp.eq.s32.totalorder %s31, 0
      %p142 = por %p140, %p141
      %s144 = sadd.s32 %s143, 1
      %p147 = scmp.eq.s32.totalorder %s25, 1
      %p148 = scmp.ne.s32.totalorder %s143, %s145
      %p149 = scmp.eq.s32.totalorder %s25, 0
      %p150 = por %p148, %p149
      %p151 = scmp.ne.s32.totalorder %s143, %s145
      %p152 = scmp.eq.s32.totalorder %s30, 1
      %p153 = por %p151, %p152
      %p154 = scmp.ne.s32.totalorder %s145, %s146
      %p155 = scmp.eq.s32.totalorder %s30, 0
      %p156 = por %p154, %p155
      %p157 = scmp.ne.s32.totalorder %s145, %s146
      %p158 = scmp.eq.s32.totalorder %s31, 1
      %p159 = por %p157, %p158
      %p161 = scmp.ne.s32.totalorder %s146, %s160
      %p162 = scmp.eq.s32.totalorder %s31, 0
      %p163 = por %p161, %p162
      %s165 = sadd.s32 %s164, 1
      %p168 = scmp.eq.s32.totalorder %s25, 1
      %p169 = scmp.ne.s32.totalorder %s164, %s166
      %p170 = scmp.eq.s32.totalorder %s25, 0
      %p171 = por %p169, %p170
      %p172 = scmp.ne.s32.totalorder %s164, %s166
      %p173 = scmp.eq.s32.totalorder %s30, 1
      %p174 = por %p172, %p173
      %p175 = scmp.ne.s32.totalorder %s166, %s167
      %p176 = scmp.eq.s32.totalorder %s30, 0
      %p177 = por %p175, %p176
      %p178 = scmp.ne.s32.totalorder %s166, %s167
      %p179 = scmp.eq.s32.totalorder %s31, 1
      %p180 = por %p178, %p179
      %p182 = scmp.ne.s32.totalorder %s167, %s181
      %p183 = scmp.eq.s32.totalorder %s31, 0
      %p184 = por %p182, %p183
      %s186 = sadd.s32 %s185, 1
      %p189 = scmp.eq.s32.totalorder %s25, 1
      %p190 = scmp.ne.s32.totalorder %s185, %s187
      %p191 = scmp.eq.s32.totalorder %s25, 0
      %p192 = por %p190, %p191
      %p193 = scmp.ne.s32.totalorder %s185, %s187
      %p194 = scmp.eq.s32.totalorder %s30, 1
      %p195 = por %p193, %p194
      %p196 = scmp.ne.s32.totalorder %s187, %s188
      %p197 = scmp.eq.s32.totalorder %s30, 0
      %p198 = por %p196, %p197
      %p199 = scmp.ne.s32.totalorder %s187, %s188
      %p200 = scmp.eq.s32.totalorder %s31, 1
      %p201 = por %p199, %p200
      %p203 = scmp.ne.s32.totalorder %s188, %s202
      %p204 = scmp.eq.s32.totalorder %s31, 0
      %p205 = por %p203, %p204
      %s207 = sadd.s32 %s206, 1
      %p210 = scmp.eq.s32.totalorder %s25, 1
      %p211 = scmp.ne.s32.totalorder %s206, %s208
      %p212 = scmp.eq.s32.totalorder %s25, 0
      %p213 = por %p211, %p212
      %p214 = scmp.ne.s32.totalorder %s206, %s208
      %p215 = scmp.eq.s32.totalorder %s30, 1
      %p216 = por %p214, %p215
      %p217 = scmp.ne.s32.totalorder %s208, %s209
      %p218 = scmp.eq.s32.totalorder %s30, 0
      %p219 = por %p217, %p218
      %p220 = scmp.ne.s32.totalorder %s208, %s209
      %p221 = scmp.eq.s32.totalorder %s31, 1
      %p222 = por %p220, %p221
      %p224 = scmp.ne.s32.totalorder %s209, %s223
      %p225 = scmp.eq.s32.totalorder %s31, 0
      %p226 = por %p224, %p225
      %s228 = sadd.s32 %s227, 1
      %p231 = scmp.eq.s32.totalorder %s25, 1
      %p232 = scmp.ne.s32.totalorder %s227, %s229
      %p233 = scmp.eq.s32.totalorder %s25, 0
      %p234 = por %p232, %p233
      %p235 = scmp.ne.s32.totalorder %s227, %s229
      %p236 = scmp.eq.s32.totalorder %s30, 1
      %p237 = por %p235, %p236
      %p238 = scmp.ne.s32.totalorder %s229, %s230
      %p239 = scmp.eq.s32.totalorder %s30, 0
      %p240 = por %p238, %p239
      %p241 = scmp.ne.s32.totalorder %s229, %s230
      %p242 = scmp.eq.s32.totalorder %s31, 1
      %p243 = por %p241, %p242
      %p245 = scmp.ne.s32.totalorder %s230, %s244
      %p246 = scmp.eq.s32.totalorder %s31, 0
      %p247 = por %p245, %p246
      %s249 = sadd.s32 %s248, 1
      %p252 = scmp.eq.s32.totalorder %s25, 1
      %p253 = scmp.ne.s32.totalorder %s248, %s250
      %p254 = scmp.eq.s32.totalorder %s25, 0
      %p255 = por %p253, %p254
      %p256 = scmp.ne.s32.totalorder %s248, %s250
      %p257 = scmp.eq.s32.totalorder %s30, 1
      %p258 = por %p256, %p257
      %p259 = scmp.ne.s32.totalorder %s250, %s251
      %p260 = scmp.eq.s32.totalorder %s30, 0
      %p261 = por %p259, %p260
      %p262 = scmp.ne.s32.totalorder %s250, %s251
      %p263 = scmp.eq.s32.totalorder %s31, 1
      %p264 = por %p262, %p263
      %p266 = scmp.ne.s32.totalorder %s251, %s265
      %p267 = scmp.eq.s32.totalorder %s31, 0
      %p268 = por %p266, %p267
      %s270 = sadd.s32 %s269, 1
      %p273 = scmp.eq.s32.totalorder %s25, 1
      %p274 = scmp.ne.s32.totalorder %s269, %s271
      %p275 = scmp.eq.s32.totalorder %s25, 0
      %p276 = por %p274, %p275
      %p277 = scmp.ne.s32.totalorder %s269, %s271
      %p278 = scmp.eq.s32.totalorder %s30, 1
      %p279 = por %p277, %p278
      %p280 = scmp.ne.s32.totalorder %s271, %s272
      %p281 = scmp.eq.s32.totalorder %s30, 0
      %p282 = por %p280, %p281
      %p283 = scmp.ne.s32.totalorder %s271, %s272
      %p284 = scmp.eq.s32.totalorder %s31, 1
      %p285 = por %p283, %p284
      %p287 = scmp.ne.s32.totalorder %s272, %s286
      %p288 = scmp.eq.s32.totalorder %s31, 0
      %p289 = por %p287, %p288
      %s290 = ssub.s32 %s25, %s32
      %p291 = scmp.eq.s32.totalorder %s290, 0
      %s293 = sadd.s32 %s292, 1
      %s294 = scalar_select %p291, %s292, %s293
      %p297 = pneg %p291
      %p298 = scmp.eq.s32.totalorder %s25, 1
      %p299 = por %p297, %p298
      %p300 = scmp.ne.s32.totalorder %s292, %s295
      %p301 = scmp.eq.s32.totalorder %s25, 0
      %p302 = por %p300, %p301
      %p303 = scmp.ne.s32.totalorder %s292, %s295
      %p304 = scmp.eq.s32.totalorder %s30, 1
      %p305 = por %p303, %p304
      %p306 = scmp.ne.s32.totalorder %s295, %s296
      %p307 = scmp.eq.s32.totalorder %s30, 0
      %p308 = por %p306, %p307
      %p309 = scmp.ne.s32.totalorder %s295, %s296
      %p310 = scmp.eq.s32.totalorder %s31, 1
      %p311 = por %p309, %p310
      %p313 = scmp.ne.s32.totalorder %s296, %s312
      %p314 = scmp.eq.s32.totalorder %s31, 0
      %p315 = por %p313, %p314
      %p316 = scmp.le.s32.totalorder 1, %s25
      %p317 = scmp.lt.s32.totalorder %s25, 3
      %p318 = pnand %p316, %p317
      %p319 = pneg %p318
      // Predicated region
      $region9: #{transformer_forward.1} parent=5 // pred_check
        _
      $region10: #{transformer_forward.1} parent=5 // pred_check_branch
        %321 = sbr.rel (%p318) target = $region12
      $region11: #{transformer_forward.1} parent=5 // pred_region
        %s322 = ssub.s32 %s25, 1
        // Predicated region
        $region13: #{transformer_forward.1} parent=11 // pred_check
          %p323 = pneg %p72
        $region14: #{transformer_forward.1} parent=11 // pred_check_branch
          %325 = sbr.rel (%p323) target = $region16
        $region15: #{transformer_forward.1} parent=11 // pred_region
          _
        $region16: #{transformer_forward.1} parent=11 // pred_fallthru
          _
        // Predicated region
        $region17: #{transformer_forward.1} parent=11 // pred_check
          %p326 = pneg %p93
        $region18: #{transformer_forward.1} parent=11 // pred_check_branch
          %328 = sbr.rel (%p326) target = $region20
        $region19: #{transformer_forward.1} parent=11 // pred_region
          _
        $region20: #{transformer_forward.1} parent=11 // pred_fallthru
          _
        // Predicated region
        $region21: #{transformer_forward.1} parent=11 // pred_check
          %p329 = pneg %p114
        $region22: #{transformer_forward.1} parent=11 // pred_check_branch
          %331 = sbr.rel (%p329) target = $region24
        $region23: #{transformer_forward.1} parent=11 // pred_region
          _
        $region24: #{transformer_forward.1} parent=11 // pred_fallthru
          _
        // Predicated region
        $region25: #{transformer_forward.1} parent=11 // pred_check
          %p332 = pneg %p135
        $region26: #{transformer_forward.1} parent=11 // pred_check_branch
          %334 = sbr.rel (%p332) target = $region28
        $region27: #{transformer_forward.1} parent=11 // pred_region
          _
        $region28: #{transformer_forward.1} parent=11 // pred_fallthru
          _
        // Predicated region
        $region29: #{transformer_forward.1} parent=11 // pred_check
          %p335 = pneg %p156
        $region30: #{transformer_forward.1} parent=11 // pred_check_branch
          %337 = sbr.rel (%p335) target = $region32
        $region31: #{transformer_forward.1} parent=11 // pred_region
          _
        $region32: #{transformer_forward.1} parent=11 // pred_fallthru
          _
        // Predicated region
        $region33: #{transformer_forward.1} parent=11 // pred_check
          %p338 = pneg %p177
        $region34: #{transformer_forward.1} parent=11 // pred_check_branch
          %340 = sbr.rel (%p338) target = $region36
        $region35: #{transformer_forward.1} parent=11 // pred_region
          _
        $region36: #{transformer_forward.1} parent=11 // pred_fallthru
          _
        // Predicated region
        $region37: #{transformer_forward.1} parent=11 // pred_check
          %p341 = pneg %p198
        $region38: #{transformer_forward.1} parent=11 // pred_check_branch
          %343 = sbr.rel (%p341) target = $region40
        $region39: #{transformer_forward.1} parent=11 // pred_region
          %s345 = ssub.s32 16, 16
          %346 = vsyncadd [#allocation6], %s345
          %s348 = sshll.u32 [#allocation5], 4
          %s349 = int_to_ptr.vmem [resolvable:$true] %s348
          %351 = dma.hbm_to_vmem [thread:$0]  %s7, 16, %s349, [#allocation6]
        $region40: #{transformer_forward.1} parent=11 // pred_fallthru
          _
        // Predicated region
        $region41: #{transformer_forward.1} parent=11 // pred_check
          %p352 = pneg %p219
        $region42: #{transformer_forward.1} parent=11 // pred_check_branch
          %354 = sbr.rel (%p352) target = $region44
        $region43: #{transformer_forward.1} parent=11 // pred_region
          _
        $region44: #{transformer_forward.1} parent=11 // pred_fallthru
          _
        // Predicated region
        $region45: #{transformer_forward.1} parent=11 // pred_check
          %p355 = pneg %p240
        $region46: #{transformer_forward.1} parent=11 // pred_check_branch
          %357 = sbr.rel (%p355) target = $region48
        $region47: #{transformer_forward.1} parent=11 // pred_region
          %s359 = ssub.s32 16, 16
          %360 = vsyncadd [#allocation6], %s359
          %s362 = sshll.u32 [#allocation7], 4
          %s363 = int_to_ptr.vmem [resolvable:$true] %s362
          %365 = dma.hbm_to_vmem [thread:$0]  %s9, 16, %s363, [#allocation6]
        $region48: #{transformer_forward.1} parent=11 // pred_fallthru
          _
        // Predicated region
        $region49: #{transformer_forward.1} parent=11 // pred_check
          %p366 = pneg %p261
        $region50: #{transformer_forward.1} parent=11 // pred_check_branch
          %368 = sbr.rel (%p366) target = $region52
        $region51: #{transformer_forward.1} parent=11 // pred_region
          _
        $region52: #{transformer_forward.1} parent=11 // pred_fallthru
          _
        // Predicated region
        $region53: #{transformer_forward.1} parent=11 // pred_check
          %p369 = pneg %p282
        $region54: #{transformer_forward.1} parent=11 // pred_check_branch
          %371 = sbr.rel (%p369) target = $region56
        $region55: #{transformer_forward.1} parent=11 // pred_region
          _
        $region56: #{transformer_forward.1} parent=11 // pred_fallthru
          _
      $region12: #{transformer_forward.1} parent=5 // pred_fallthru
        _
      %p372 = scmp.lt.s32.totalorder %s25, 2
      // Predicated region
      $region57: #{transformer_forward.1} parent=5 // pred_check
        %p373 = pneg %p372
      $region58: #{transformer_forward.1} parent=5 // pred_check_branch
        %375 = sbr.rel (%p373) target = $region60
      $region59: #{transformer_forward.1} parent=5 // pred_region
        // Predicated region
        $region61: #{transformer_forward.1} parent=59 // pred_check
          %p376 = pneg %p45
        $region62: #{transformer_forward.1} parent=59 // pred_check_branch
          %378 = sbr.rel (%p376) target = $region64
        $region63: #{transformer_forward.1} parent=59 // pred_region
          %s379 = sand.u32 %s35, 1
          %s380 = scalar_lea.sflag [#allocation3], %s379
          %s381 = sand.u32 %s35, 1
          %s382 = smul.addr %s381, 8
          %s383 = scalar_lea.vmem [#allocation2], %s382
          %s385 = ssub.s32 128, 128
          %386 = vsyncadd %s380, %s385
          %s387 = smul.addr %s25, 128
          %s388 = scalar_lea.hbm %s0, %s387
          %s390 = sshll.u32 %s383, 4
          %s391 = int_to_ptr.vmem [resolvable:$true] %s390
          %393 = dma.hbm_to_vmem [thread:$0]  %s388, 128, %s391, %s380
        $region64: #{transformer_forward.1} parent=59 // pred_fallthru
          _
      $region60: #{transformer_forward.1} parent=5 // pred_fallthru
        _
      %p394 = scmp.le.s32.totalorder 1, %s25
      %p395 = scmp.lt.s32.totalorder %s25, 3
      %p396 = pnand %p394, %p395
      %p397 = pneg %p396
      // Predicated region
      $region65: #{transformer_forward.1} parent=5 // pred_check
        _
      $region66: #{transformer_forward.1} parent=5 // pred_check_branch
        %399 = sbr.rel (%p396) target = $region68
      $region67: #{transformer_forward.1} parent=5 // pred_region
        %s400 = ssub.s32 %s25, 1
        %s401 = sand.u32 %s38, 1
        %s402 = scalar_lea.sflag [#allocation3], %s401
        %s403 = sand.u32 %s38, 1
        %s404 = smul.addr %s403, 8
        %s405 = scalar_lea.vmem [#allocation2], %s404
        // Predicated region
        $region69: #{transformer_forward.1} parent=67 // pred_check
          %p406 = pneg %p51
        $region70: #{transformer_forward.1} parent=67 // pred_check_branch
          %408 = sbr.rel (%p406) target = $region72
        $region71: #{transformer_forward.1} parent=67 // pred_region
          %409 = dma.done %s402, 128
        $region72: #{transformer_forward.1} parent=67 // pred_fallthru
          _
        // Predicated region
        $region73: #{transformer_forward.1} parent=67 // pred_check
          %p410 = pneg %p198
        $region74: #{transformer_forward.1} parent=67 // pred_check_branch
          %412 = sbr.rel (%p410) target = $region76
        $region75: #{transformer_forward.1} parent=67 // pred_region
          %413 = dma.done [#allocation6], 16
        $region76: #{transformer_forward.1} parent=67 // pred_fallthru
          _
        // Predicated region
        $region77: #{transformer_forward.1} parent=67 // pred_check
          %p414 = pneg %p240
        $region78: #{transformer_forward.1} parent=67 // pred_check_branch
          %416 = sbr.rel (%p414) target = $region80
        $region79: #{transformer_forward.1} parent=67 // pred_region
          %417 = dma.done [#allocation6], 16
        $region80: #{transformer_forward.1} parent=67 // pred_fallthru
          _
        %s418 = sand.u32 %s38, 1
        %s419 = scalar_lea.sflag [#allocation3], %s418
        %s420 = sand.u32 %s38, 1
        %s421 = smul.addr %s420, 8
        %s422 = scalar_lea.vmem [#allocation2], %s421
        %p423 = pneg %p51
        %p424 = pneg %p48
        %p425 = pneg %p72
        %p426 = pneg %p69
        %p427 = pneg %p93
        %p428 = pneg %p90
        %p429 = pneg %p114
        %p430 = pneg %p111
        %p431 = pneg %p135
        %p432 = pneg %p132
        %p433 = pneg %p156
        %p434 = pneg %p153
        %p435 = pneg %p177
        %p436 = pneg %p174
        %p437 = pneg %p198
        %p438 = pneg %p195
        %p439 = pneg %p219
        %p440 = pneg %p216
        %p441 = pneg %p240
        %p442 = pneg %p237
        %p443 = pneg %p261
        %p444 = pneg %p258
        %p445 = pneg %p282
        %p446 = pneg %p279
        %p447 = pneg %p308
        %p448 = pneg %p305
        %s449 = sand.u32 %s295, 1
        %s450 = scalar_lea.sflag [#allocation4], %s449
        %s451 = sand.u32 %s295, 1
        %s452 = smul.addr %s451, 8
        %s453 = scalar_lea.vmem [#allocation8], %s452
        %v454 = vld [vmem:[%s405] sm:$0xff]
        %v455 = vld [vmem:[%s1] sm:$0xff]
        %v456 = vld [vmem:[%s1 + $0x8] sm:$0xff]
        %v457 = vld [vmem:[%s1 + $0x10] sm:$0xff]
        %v458 = vld [vmem:[%s1 + $0x18] sm:$0xff]
        %vm459 = vcmask 261120
        %v461 = vsel %vm459, %v454, 0
        %463 = vmatprep.subr.mxu0 0.0
        %464 = vmatpush1.msra.mxu0 0.0
        %465 = vmatprep.subr.mxu0 0.0
        %466 = vmatpush1.msra.mxu0 0.0
        %467 = vmatprep.subr.mxu0 0.0
        %468 = vmatpush1.msra.mxu0 0.0
        %469 = vmatprep.subr.mxu0 0.0
        %470 = vmatpush1.msra.mxu0 0.0
        %471 = vmatprep.subr.mxu0 0.0
        %472 = vmatpush1.msra.mxu0 0.0
        %473 = vmatprep.subr.mxu0 0.0
        %474 = vmatpush1.msra.mxu0 0.0
        %475 = vmatprep.subr.mxu0 0.0
        %476 = vmatpush1.msra.mxu0 0.0
        %477 = vmatprep.subr.mxu0 0.0
        %478 = vmatpush1.msra.mxu0 0.0
        %479 = vmatprep.subr.mxu0 0.0
        %480 = vmatpush1.msra.mxu0 0.0
        %481 = vmatprep.subr.mxu0 0.0
        %482 = vmatpush1.msra.mxu0 0.0
        %483 = vmatprep.subr.mxu0 0.0
        %484 = vmatpush1.msra.mxu0 0.0
        %485 = vmatprep.subr.mxu0 0.0
        %486 = vmatpush1.msra.mxu0 0.0
        %487 = vmatprep.subr.mxu0 0.0
        %488 = vmatpush1.msra.mxu0 %v458
        %489 = vmatprep.subr.mxu0 0.0
        %490 = vmatpush1.msra.mxu0 %v457
        %491 = vmatprep.subr.mxu0 0.0
        %492 = vmatpush1.msra.mxu0 %v456
        %493 = vmatprep.subr.mxu0 0.0
        %494 = vmatpush1.msra.mxu0 %v455
        %495 = vmatprep.subr.mxu0 0.0
        %496 = vmatpush2.msra.mxu0 0.0
        %497 = vmatprep.subr.mxu0 0.0
        %498 = vmatpush2.msra.mxu0 0.0
        %499 = vmatprep.subr.mxu0 0.0
        %500 = vmatpush2.msra.mxu0 0.0
        %501 = vmatprep.subr.mxu0 0.0
        %502 = vmatpush2.msra.mxu0 0.0
        %503 = vmatprep.subr.mxu0 0.0
        %504 = vmatpush2.msra.mxu0 0.0
        %505 = vmatprep.subr.mxu0 0.0
        %506 = vmatpush2.msra.mxu0 0.0
        %507 = vmatprep.subr.mxu0 0.0
        %508 = vmatpush2.msra.mxu0 0.0
        %509 = vmatprep.subr.mxu0 0.0
        %510 = vmatpush2.msra.mxu0 0.0
        %511 = vmatprep.subr.mxu0 0.0
        %512 = vmatpush2.msra.mxu0 0.0
        %513 = vmatprep.subr.mxu0 0.0
        %514 = vmatpush2.msra.mxu0 0.0
        %515 = vmatprep.subr.mxu0 0.0
        %516 = vmatpush2.msra.mxu0 0.0
        %517 = vmatprep.subr.mxu0 0.0
        %518 = vmatpush2.msra.mxu0 0.0
        %519 = vmatprep.subr.mxu0 0.0
        %520 = vmatpush2.msra.mxu0 0.0
        %521 = vmatprep.subr.mxu0 0.0
        %522 = vmatpush2.msra.mxu0 0.0
        %523 = vmatprep.subr.mxu0 0.0
        %524 = vmatpush2.msra.mxu0 0.0
        %525 = vmatprep.subr.mxu0 0.0
        %526 = vmatpush2.msra.mxu0 0.0
        %527 = vmatprep.mubr.f32.mxu0 0.0
        %528 = vmatmul.mubr.f32.gmra.mxu0 %v461
        %v529 = vpop.f32.mrf.mxu0
        %v530 = vadd.f32 0.0, %v529
        %v531 = vpop.f32.mrf.mxu0
        %532 = vdwg.mxu0
        %v533 = vmul.f32 %v530, 0.35355338
        %535 = vrot.lane.b32.xlu0 %v530, 96
        %v536 = vpop.permute.xlu0 %535
        %vm537 = vcmask 64512
        %v539 = vsel %vm537, %v533, 0
        %v541 = vsel %vm537, %v536, 0
        %543 = vmatprep.subr.mxu0 0.0
        %544 = vmatpush1.xpose.msra.mxu0 0.0
        %545 = vmatprep.subr.mxu0 0.0
        %546 = vmatpush1.xpose.msra.mxu0 0.0
        %547 = vmatprep.subr.mxu0 0.0
        %548 = vmatpush1.xpose.msra.mxu0 0.0
        %549 = vmatprep.subr.mxu0 0.0
        %550 = vmatpush1.xpose.msra.mxu0 0.0
        %551 = vmatprep.subr.mxu0 0.0
        %552 = vmatpush1.xpose.msra.mxu0 0.0
        %553 = vmatprep.subr.mxu0 0.0
        %554 = vmatpush1.xpose.msra.mxu0 0.0
        %555 = vmatprep.subr.mxu0 0.0
        %556 = vmatpush1.xpose.msra.mxu0 0.0
        %557 = vmatprep.subr.mxu0 0.0
        %558 = vmatpush1.xpose.msra.mxu0 0.0
        %559 = vmatprep.subr.mxu0 0.0
        %560 = vmatpush1.xpose.msra.mxu0 0.0
        %561 = vmatprep.subr.mxu0 0.0
        %562 = vmatpush1.xpose.msra.mxu0 0.0
        %563 = vmatprep.subr.mxu0 0.0
        %564 = vmatpush1.xpose.msra.mxu0 0.0
        %565 = vmatprep.subr.mxu0 0.0
        %566 = vmatpush1.xpose.msra.mxu0 0.0
        %567 = vmatprep.subr.mxu0 0.0
        %568 = vmatpush1.xpose.msra.mxu0 0.0
        %569 = vmatprep.subr.mxu0 0.0
        %570 = vmatpush1.xpose.msra.mxu0 0.0
        %571 = vmatprep.subr.mxu0 0.0
        %572 = vmatpush1.xpose.msra.mxu0 0.0
        %573 = vmatprep.subr.mxu0 0.0
        %574 = vmatpush1.xpose.msra.mxu0 %v541
        %575 = vmatprep.subr.mxu0 0.0
        %576 = vmatpush2.xpose.msra.mxu0 0.0
        %577 = vmatprep.subr.mxu0 0.0
        %578 = vmatpush2.xpose.msra.mxu0 0.0
        %579 = vmatprep.subr.mxu0 0.0
        %580 = vmatpush2.xpose.msra.mxu0 0.0
        %581 = vmatprep.subr.mxu0 0.0
        %582 = vmatpush2.xpose.msra.mxu0 0.0
        %583 = vmatprep.subr.mxu0 0.0
        %584 = vmatpush2.xpose.msra.mxu0 0.0
        %585 = vmatprep.subr.mxu0 0.0
        %586 = vmatpush2.xpose.msra.mxu0 0.0
        %587 = vmatprep.subr.mxu0 0.0
        %588 = vmatpush2.xpose.msra.mxu0 0.0
        %589 = vmatprep.subr.mxu0 0.0
        %590 = vmatpush2.xpose.msra.mxu0 0.0
        %591 = vmatprep.subr.mxu0 0.0
        %592 = vmatpush2.xpose.msra.mxu0 0.0
        %593 = vmatprep.subr.mxu0 0.0
        %594 = vmatpush2.xpose.msra.mxu0 0.0
        %595 = vmatprep.subr.mxu0 0.0
        %596 = vmatpush2.xpose.msra.mxu0 0.0
        %597 = vmatprep.subr.mxu0 0.0
        %598 = vmatpush2.xpose.msra.mxu0 0.0
        %599 = vmatprep.subr.mxu0 0.0
        %600 = vmatpush2.xpose.msra.mxu0 0.0
        %601 = vmatprep.subr.mxu0 0.0
        %602 = vmatpush2.xpose.msra.mxu0 0.0
        %603 = vmatprep.subr.mxu0 0.0
        %604 = vmatpush2.xpose.msra.mxu0 0.0
        %605 = vmatprep.subr.mxu0 0.0
        %606 = vmatpush2.xpose.msra.mxu0 0.0
        %607 = vmatprep.mubr.f32.mxu0 0.0
        %608 = vmatmul.mubr.f32.gmra.mxu0 %v539
        %v609 = vpop.f32.mrf.mxu0
        %v610 = vadd.f32 0.0, %v609
        %v611 = vpop.f32.mrf.mxu0
        %612 = vdwg.mxu0
        %v613 = vsel %vm537, %v610, -inf
        %614 = vmax.xlane.f32.xlu0 %v613
        %v615 = vpop.xlane.xlu0 %614
        %v616 = vsub.f32 %v610, %v615
        %v617 = vmul.f32 %v616, 1.442695
        %v618 = vpow.pop %v617
        %v619 = vsel %vm537, %v618, 0.0
        %620 = vadd.xlane.f32.xlu0 %v619
        %v621 = vpop.xlane.xlu0 %620
        %622 = vrot.lane.b32.xlu0 %v530, 64
        %v623 = vpop.permute.xlu0 %622
        %v626 = vsel %vm537, %v618, 0
        %628 = vmatprep.subr.mxu0 0.0
        %629 = vmatpush1.msra.mxu0 0.0
        %630 = vmatprep.subr.mxu0 0.0
        %631 = vmatpush1.msra.mxu0 0.0
        %632 = vmatprep.subr.mxu0 0.0
        %633 = vmatpush1.msra.mxu0 0.0
        %634 = vmatprep.subr.mxu0 0.0
        %635 = vmatpush1.msra.mxu0 0.0
        %636 = vmatprep.subr.mxu0 0.0
        %637 = vmatpush1.msra.mxu0 0.0
        %638 = vmatprep.subr.mxu0 0.0
        %639 = vmatpush1.msra.mxu0 0.0
        %640 = vmatprep.subr.mxu0 0.0
        %641 = vmatpush1.msra.mxu0 0.0
        %642 = vmatprep.subr.mxu0 0.0
        %643 = vmatpush1.msra.mxu0 0.0
        %644 = vmatprep.subr.mxu0 0.0
        %645 = vmatpush1.msra.mxu0 0.0
        %646 = vmatprep.subr.mxu0 0.0
        %647 = vmatpush1.msra.mxu0 0.0
        %648 = vmatprep.subr.mxu0 0.0
        %649 = vmatpush1.msra.mxu0 0.0
        %650 = vmatprep.subr.mxu0 0.0
        %651 = vmatpush1.msra.mxu0 0.0
        %652 = vmatprep.subr.mxu0 0.0
        %653 = vmatpush1.msra.mxu0 0.0
        %654 = vmatprep.subr.mxu0 0.0
        %655 = vmatpush1.msra.mxu0 0.0
        %656 = vmatprep.subr.mxu0 0.0
        %657 = vmatpush1.msra.mxu0 0.0
        %658 = vmatprep.subr.mxu0 0.0
        %659 = vmatpush1.msra.mxu0 %v623
        %660 = vmatprep.subr.mxu0 0.0
        %661 = vmatpush2.msra.mxu0 0.0
        %662 = vmatprep.subr.mxu0 0.0
        %663 = vmatpush2.msra.mxu0 0.0
        %664 = vmatprep.subr.mxu0 0.0
        %665 = vmatpush2.msra.mxu0 0.0
        %666 = vmatprep.subr.mxu0 0.0
        %667 = vmatpush2.msra.mxu0 0.0
        %668 = vmatprep.subr.mxu0 0.0
        %669 = vmatpush2.msra.mxu0 0.0
        %670 = vmatprep.subr.mxu0 0.0
        %671 = vmatpush2.msra.mxu0 0.0
        %672 = vmatprep.subr.mxu0 0.0
        %673 = vmatpush2.msra.mxu0 0.0
        %674 = vmatprep.subr.mxu0 0.0
        %675 = vmatpush2.msra.mxu0 0.0
        %676 = vmatprep.subr.mxu0 0.0
        %677 = vmatpush2.msra.mxu0 0.0
        %678 = vmatprep.subr.mxu0 0.0
        %679 = vmatpush2.msra.mxu0 0.0
        %680 = vmatprep.subr.mxu0 0.0
        %681 = vmatpush2.msra.mxu0 0.0
        %682 = vmatprep.subr.mxu0 0.0
        %683 = vmatpush2.msra.mxu0 0.0
        %684 = vmatprep.subr.mxu0 0.0
        %685 = vmatpush2.msra.mxu0 0.0
        %686 = vmatprep.subr.mxu0 0.0
        %687 = vmatpush2.msra.mxu0 0.0
        %688 = vmatprep.subr.mxu0 0.0
        %689 = vmatpush2.msra.mxu0 0.0
        %690 = vmatprep.subr.mxu0 0.0
        %691 = vmatpush2.msra.mxu0 0.0
        %692 = vmatprep.mubr.f32.mxu0 0.0
        %693 = vmatmul.mubr.f32.gmra.mxu0 %v626
        %v694 = vpop.f32.mrf.mxu0
        %v695 = vadd.f32 0.0, %v694
        %v696 = vpop.f32.mrf.mxu0
        %697 = vdwg.mxu0
        %v698 = vrcp.pop %v621
        %v699 = vmul.f32 %v695, %v698
        %700 = vrot.lane.b32.xlu0 %v533, 120
        %v701 = vpop.permute.xlu0 %700
        %702 = vrot.lane.b32.xlu0 %v530, 88
        %v703 = vpop.permute.xlu0 %702
        %v704 = vsel %vm537, %v701, 0
        %v706 = vsel %vm537, %v703, 0
        %708 = vmatprep.subr.mxu0 0.0
        %709 = vmatpush1.xpose.msra.mxu0 0.0
        %710 = vmatprep.subr.mxu0 0.0
        %711 = vmatpush1.xpose.msra.mxu0 0.0
        %712 = vmatprep.subr.mxu0 0.0
        %713 = vmatpush1.xpose.msra.mxu0 0.0
        %714 = vmatprep.subr.mxu0 0.0
        %715 = vmatpush1.xpose.msra.mxu0 0.0
        %716 = vmatprep.subr.mxu0 0.0
        %717 = vmatpush1.xpose.msra.mxu0 0.0
        %718 = vmatprep.subr.mxu0 0.0
        %719 = vmatpush1.xpose.msra.mxu0 0.0
        %720 = vmatprep.subr.mxu0 0.0
        %721 = vmatpush1.xpose.msra.mxu0 0.0
        %722 = vmatprep.subr.mxu0 0.0
        %723 = vmatpush1.xpose.msra.mxu0 0.0
        %724 = vmatprep.subr.mxu0 0.0
        %725 = vmatpush1.xpose.msra.mxu0 0.0
        %726 = vmatprep.subr.mxu0 0.0
        %727 = vmatpush1.xpose.msra.mxu0 0.0
        %728 = vmatprep.subr.mxu0 0.0
        %729 = vmatpush1.xpose.msra.mxu0 0.0
        %730 = vmatprep.subr.mxu0 0.0
        %731 = vmatpush1.xpose.msra.mxu0 0.0
        %732 = vmatprep.subr.mxu0 0.0
        %733 = vmatpush1.xpose.msra.mxu0 0.0
        %734 = vmatprep.subr.mxu0 0.0
        %735 = vmatpush1.xpose.msra.mxu0 0.0
        %736 = vmatprep.subr.mxu0 0.0
        %737 = vmatpush1.xpose.msra.mxu0 0.0
        %738 = vmatprep.subr.mxu0 0.0
        %739 = vmatpush1.xpose.msra.mxu0 %v706
        %740 = vmatprep.subr.mxu0 0.0
        %741 = vmatpush2.xpose.msra.mxu0 0.0
        %742 = vmatprep.subr.mxu0 0.0
        %743 = vmatpush2.xpose.msra.mxu0 0.0
        %744 = vmatprep.subr.mxu0 0.0
        %745 = vmatpush2.xpose.msra.mxu0 0.0
        %746 = vmatprep.subr.mxu0 0.0
        %747 = vmatpush2.xpose.msra.mxu0 0.0
        %748 = vmatprep.subr.mxu0 0.0
        %749 = vmatpush2.xpose.msra.mxu0 0.0
        %750 = vmatprep.subr.mxu0 0.0
        %751 = vmatpush2.xpose.msra.mxu0 0.0
        %752 = vmatprep.subr.mxu0 0.0
        %753 = vmatpush2.xpose.msra.mxu0 0.0
        %754 = vmatprep.subr.mxu0 0.0
        %755 = vmatpush2.xpose.msra.mxu0 0.0
        %756 = vmatprep.subr.mxu0 0.0
        %757 = vmatpush2.xpose.msra.mxu0 0.0
        %758 = vmatprep.subr.mxu0 0.0
        %759 = vmatpush2.xpose.msra.mxu0 0.0
        %760 = vmatprep.subr.mxu0 0.0
        %761 = vmatpush2.xpose.msra.mxu0 0.0
        %762 = vmatprep.subr.mxu0 0.0
        %763 = vmatpush2.xpose.msra.mxu0 0.0
        %764 = vmatprep.subr.mxu0 0.0
        %765 = vmatpush2.xpose.msra.mxu0 0.0
        %766 = vmatprep.subr.mxu0 0.0
        %767 = vmatpush2.xpose.msra.mxu0 0.0
        %768 = vmatprep.subr.mxu0 0.0
        %769 = vmatpush2.xpose.msra.mxu0 0.0
        %770 = vmatprep.subr.mxu0 0.0
        %771 = vmatpush2.xpose.msra.mxu0 0.0
        %772 = vmatprep.mubr.f32.mxu0 0.0
        %773 = vmatmul.mubr.f32.gmra.mxu0 %v704
        %v774 = vpop.f32.mrf.mxu0
        %v775 = vadd.f32 0.0, %v774
        %v776 = vpop.f32.mrf.mxu0
        %777 = vdwg.mxu0
        %v778 = vsel %vm537, %v775, -inf
        %779 = vmax.xlane.f32.xlu0 %v778
        %v780 = vpop.xlane.xlu0 %779
        %v781 = vsub.f32 %v775, %v780
        %v782 = vmul.f32 %v781, 1.442695
        %v783 = vpow.pop %v782
        %v784 = vsel %vm537, %v783, 0.0
        %785 = vadd.xlane.f32.xlu0 %v784
        %v786 = vpop.xlane.xlu0 %785
        %787 = vrot.lane.b32.xlu0 %v530, 56
        %v788 = vpop.permute.xlu0 %787
        %v791 = vsel %vm537, %v783, 0
        %793 = vmatprep.subr.mxu0 0.0
        %794 = vmatpush1.msra.mxu0 0.0
        %795 = vmatprep.subr.mxu0 0.0
        %796 = vmatpush1.msra.mxu0 0.0
        %797 = vmatprep.subr.mxu0 0.0
        %798 = vmatpush1.msra.mxu0 0.0
        %799 = vmatprep.subr.mxu0 0.0
        %800 = vmatpush1.msra.mxu0 0.0
        %801 = vmatprep.subr.mxu0 0.0
        %802 = vmatpush1.msra.mxu0 0.0
        %803 = vmatprep.subr.mxu0 0.0
        %804 = vmatpush1.msra.mxu0 0.0
        %805 = vmatprep.subr.mxu0 0.0
        %806 = vmatpush1.msra.mxu0 0.0
        %807 = vmatprep.subr.mxu0 0.0
        %808 = vmatpush1.msra.mxu0 0.0
        %809 = vmatprep.subr.mxu0 0.0
        %810 = vmatpush1.msra.mxu0 0.0
        %811 = vmatprep.subr.mxu0 0.0
        %812 = vmatpush1.msra.mxu0 0.0
        %813 = vmatprep.subr.mxu0 0.0
        %814 = vmatpush1.msra.mxu0 0.0
        %815 = vmatprep.subr.mxu0 0.0
        %816 = vmatpush1.msra.mxu0 0.0
        %817 = vmatprep.subr.mxu0 0.0
        %818 = vmatpush1.msra.mxu0 0.0
        %819 = vmatprep.subr.mxu0 0.0
        %820 = vmatpush1.msra.mxu0 0.0
        %821 = vmatprep.subr.mxu0 0.0
        %822 = vmatpush1.msra.mxu0 0.0
        %823 = vmatprep.subr.mxu0 0.0
        %824 = vmatpush1.msra.mxu0 %v788
        %825 = vmatprep.subr.mxu0 0.0
        %826 = vmatpush2.msra.mxu0 0.0
        %827 = vmatprep.subr.mxu0 0.0
        %828 = vmatpush2.msra.mxu0 0.0
        %829 = vmatprep.subr.mxu0 0.0
        %830 = vmatpush2.msra.mxu0 0.0
        %831 = vmatprep.subr.mxu0 0.0
        %832 = vmatpush2.msra.mxu0 0.0
        %833 = vmatprep.subr.mxu0 0.0
        %834 = vmatpush2.msra.mxu0 0.0
        %835 = vmatprep.subr.mxu0 0.0
        %836 = vmatpush2.msra.mxu0 0.0
        %837 = vmatprep.subr.mxu0 0.0
        %838 = vmatpush2.msra.mxu0 0.0
        %839 = vmatprep.subr.mxu0 0.0
        %840 = vmatpush2.msra.mxu0 0.0
        %841 = vmatprep.subr.mxu0 0.0
        %842 = vmatpush2.msra.mxu0 0.0
        %843 = vmatprep.subr.mxu0 0.0
        %844 = vmatpush2.msra.mxu0 0.0
        %845 = vmatprep.subr.mxu0 0.0
        %846 = vmatpush2.msra.mxu0 0.0
        %847 = vmatprep.subr.mxu0 0.0
        %848 = vmatpush2.msra.mxu0 0.0
        %849 = vmatprep.subr.mxu0 0.0
        %850 = vmatpush2.msra.mxu0 0.0
        %851 = vmatprep.subr.mxu0 0.0
        %852 = vmatpush2.msra.mxu0 0.0
        %853 = vmatprep.subr.mxu0 0.0
        %854 = vmatpush2.msra.mxu0 0.0
        %855 = vmatprep.subr.mxu0 0.0
        %856 = vmatpush2.msra.mxu0 0.0
        %857 = vmatprep.mubr.f32.mxu0 0.0
        %858 = vmatmul.mubr.f32.gmra.mxu0 %v791
        %v859 = vpop.f32.mrf.mxu0
        %v860 = vadd.f32 0.0, %v859
        %v861 = vpop.f32.mrf.mxu0
        %862 = vdwg.mxu0
        %v863 = vrcp.pop %v786
        %v864 = vmul.f32 %v860, %v863
        %865 = vrot.lane.b32.xlu0 %v533, 112
        %v866 = vpop.permute.xlu0 %865
        %867 = vrot.lane.b32.xlu0 %v530, 80
        %v868 = vpop.permute.xlu0 %867
        %v869 = vsel %vm537, %v866, 0
        %v871 = vsel %vm537, %v868, 0
        %873 = vmatprep.subr.mxu0 0.0
        %874 = vmatpush1.xpose.msra.mxu0 0.0
        %875 = vmatprep.subr.mxu0 0.0
        %876 = vmatpush1.xpose.msra.mxu0 0.0
        %877 = vmatprep.subr.mxu0 0.0
        %878 = vmatpush1.xpose.msra.mxu0 0.0
        %879 = vmatprep.subr.mxu0 0.0
        %880 = vmatpush1.xpose.msra.mxu0 0.0
        %881 = vmatprep.subr.mxu0 0.0
        %882 = vmatpush1.xpose.msra.mxu0 0.0
        %883 = vmatprep.subr.mxu0 0.0
        %884 = vmatpush1.xpose.msra.mxu0 0.0
        %885 = vmatprep.subr.mxu0 0.0
        %886 = vmatpush1.xpose.msra.mxu0 0.0
        %887 = vmatprep.subr.mxu0 0.0
        %888 = vmatpush1.xpose.msra.mxu0 0.0
        %889 = vmatprep.subr.mxu0 0.0
        %890 = vmatpush1.xpose.msra.mxu0 0.0
        %891 = vmatprep.subr.mxu0 0.0
        %892 = vmatpush1.xpose.msra.mxu0 0.0
        %893 = vmatprep.subr.mxu0 0.0
        %894 = vmatpush1.xpose.msra.mxu0 0.0
        %895 = vmatprep.subr.mxu0 0.0
        %896 = vmatpush1.xpose.msra.mxu0 0.0
        %897 = vmatprep.subr.mxu0 0.0
        %898 = vmatpush1.xpose.msra.mxu0 0.0
        %899 = vmatprep.subr.mxu0 0.0
        %900 = vmatpush1.xpose.msra.mxu0 0.0
        %901 = vmatprep.subr.mxu0 0.0
        %902 = vmatpush1.xpose.msra.mxu0 0.0
        %903 = vmatprep.subr.mxu0 0.0
        %904 = vmatpush1.xpose.msra.mxu0 %v871
        %905 = vmatprep.subr.mxu0 0.0
        %906 = vmatpush2.xpose.msra.mxu0 0.0
        %907 = vmatprep.subr.mxu0 0.0
        %908 = vmatpush2.xpose.msra.mxu0 0.0
        %909 = vmatprep.subr.mxu0 0.0
        %910 = vmatpush2.xpose.msra.mxu0 0.0
        %911 = vmatprep.subr.mxu0 0.0
        %912 = vmatpush2.xpose.msra.mxu0 0.0
        %913 = vmatprep.subr.mxu0 0.0
        %914 = vmatpush2.xpose.msra.mxu0 0.0
        %915 = vmatprep.subr.mxu0 0.0
        %916 = vmatpush2.xpose.msra.mxu0 0.0
        %917 = vmatprep.subr.mxu0 0.0
        %918 = vmatpush2.xpose.msra.mxu0 0.0
        %919 = vmatprep.subr.mxu0 0.0
        %920 = vmatpush2.xpose.msra.mxu0 0.0
        %921 = vmatprep.subr.mxu0 0.0
        %922 = vmatpush2.xpose.msra.mxu0 0.0
        %923 = vmatprep.subr.mxu0 0.0
        %924 = vmatpush2.xpose.msra.mxu0 0.0
        %925 = vmatprep.subr.mxu0 0.0
        %926 = vmatpush2.xpose.msra.mxu0 0.0
        %927 = vmatprep.subr.mxu0 0.0
        %928 = vmatpush2.xpose.msra.mxu0 0.0
        %929 = vmatprep.subr.mxu0 0.0
        %930 = vmatpush2.xpose.msra.mxu0 0.0
        %931 = vmatprep.subr.mxu0 0.0
        %932 = vmatpush2.xpose.msra.mxu0 0.0
        %933 = vmatprep.subr.mxu0 0.0
        %934 = vmatpush2.xpose.msra.mxu0 0.0
        %935 = vmatprep.subr.mxu0 0.0
        %936 = vmatpush2.xpose.msra.mxu0 0.0
        %937 = vmatprep.mubr.f32.mxu0 0.0
        %938 = vmatmul.mubr.f32.gmra.mxu0 %v869
        %v939 = vpop.f32.mrf.mxu0
        %v940 = vadd.f32 0.0, %v939
        %v941 = vpop.f32.mrf.mxu0
        %942 = vdwg.mxu0
        %v943 = vsel %vm537, %v940, -inf
        %944 = vmax.xlane.f32.xlu0 %v943
        %v945 = vpop.xlane.xlu0 %944
        %v946 = vsub.f32 %v940, %v945
        %v947 = vmul.f32 %v946, 1.442695
        %v948 = vpow.pop %v947
        %v949 = vsel %vm537, %v948, 0.0
        %950 = vadd.xlane.f32.xlu0 %v949
        %v951 = vpop.xlane.xlu0 %950
        %952 = vrot.lane.b32.xlu0 %v530, 48
        %v953 = vpop.permute.xlu0 %952
        %v956 = vsel %vm537, %v948, 0
        %958 = vmatprep.subr.mxu0 0.0
        %959 = vmatpush1.msra.mxu0 0.0
        %960 = vmatprep.subr.mxu0 0.0
        %961 = vmatpush1.msra.mxu0 0.0
        %962 = vmatprep.subr.mxu0 0.0
        %963 = vmatpush1.msra.mxu0 0.0
        %964 = vmatprep.subr.mxu0 0.0
        %965 = vmatpush1.msra.mxu0 0.0
        %966 = vmatprep.subr.mxu0 0.0
        %967 = vmatpush1.msra.mxu0 0.0
        %968 = vmatprep.subr.mxu0 0.0
        %969 = vmatpush1.msra.mxu0 0.0
        %970 = vmatprep.subr.mxu0 0.0
        %971 = vmatpush1.msra.mxu0 0.0
        %972 = vmatprep.subr.mxu0 0.0
        %973 = vmatpush1.msra.mxu0 0.0
        %974 = vmatprep.subr.mxu0 0.0
        %975 = vmatpush1.msra.mxu0 0.0
        %976 = vmatprep.subr.mxu0 0.0
        %977 = vmatpush1.msra.mxu0 0.0
        %978 = vmatprep.subr.mxu0 0.0
        %979 = vmatpush1.msra.mxu0 0.0
        %980 = vmatprep.subr.mxu0 0.0
        %981 = vmatpush1.msra.mxu0 0.0
        %982 = vmatprep.subr.mxu0 0.0
        %983 = vmatpush1.msra.mxu0 0.0
        %984 = vmatprep.subr.mxu0 0.0
        %985 = vmatpush1.msra.mxu0 0.0
        %986 = vmatprep.subr.mxu0 0.0
        %987 = vmatpush1.msra.mxu0 0.0
        %988 = vmatprep.subr.mxu0 0.0
        %989 = vmatpush1.msra.mxu0 %v953
        %990 = vmatprep.subr.mxu0 0.0
        %991 = vmatpush2.msra.mxu0 0.0
        %992 = vmatprep.subr.mxu0 0.0
        %993 = vmatpush2.msra.mxu0 0.0
        %994 = vmatprep.subr.mxu0 0.0
        %995 = vmatpush2.msra.mxu0 0.0
        %996 = vmatprep.subr.mxu0 0.0
        %997 = vmatpush2.msra.mxu0 0.0
        %998 = vmatprep.subr.mxu0 0.0
        %999 = vmatpush2.msra.mxu0 0.0
        %1000 = vmatprep.subr.mxu0 0.0
        %1001 = vmatpush2.msra.mxu0 0.0
        %1002 = vmatprep.subr.mxu0 0.0
        %1003 = vmatpush2.msra.mxu0 0.0
        %1004 = vmatprep.subr.mxu0 0.0
        %1005 = vmatpush2.msra.mxu0 0.0
        %1006 = vmatprep.subr.mxu0 0.0
        %1007 = vmatpush2.msra.mxu0 0.0
        %1008 = vmatprep.subr.mxu0 0.0
        %1009 = vmatpush2.msra.mxu0 0.0
        %1010 = vmatprep.subr.mxu0 0.0
        %1011 = vmatpush2.msra.mxu0 0.0
        %1012 = vmatprep.subr.mxu0 0.0
        %1013 = vmatpush2.msra.mxu0 0.0
        %1014 = vmatprep.subr.mxu0 0.0
        %1015 = vmatpush2.msra.mxu0 0.0
        %1016 = vmatprep.subr.mxu0 0.0
        %1017 = vmatpush2.msra.mxu0 0.0
        %1018 = vmatprep.subr.mxu0 0.0
        %1019 = vmatpush2.msra.mxu0 0.0
        %1020 = vmatprep.subr.mxu0 0.0
        %1021 = vmatpush2.msra.mxu0 0.0
        %1022 = vmatprep.mubr.f32.mxu0 0.0
        %1023 = vmatmul.mubr.f32.gmra.mxu0 %v956
        %v1024 = vpop.f32.mrf.mxu0
        %v1025 = vadd.f32 0.0, %v1024
        %v1026 = vpop.f32.mrf.mxu0
        %1027 = vdwg.mxu0
        %v1028 = vrcp.pop %v951
        %v1029 = vmul.f32 %v1025, %v1028
        %1030 = vrot.lane.b32.xlu0 %v533, 104
        %v1031 = vpop.permute.xlu0 %1030
        %1032 = vrot.lane.b32.xlu0 %v530, 72
        %v1033 = vpop.permute.xlu0 %1032
        %v1034 = vsel %vm537, %v1031, 0
        %v1036 = vsel %vm537, %v1033, 0
        %1038 = vmatprep.subr.mxu0 0.0
        %1039 = vmatpush1.xpose.msra.mxu0 0.0
        %1040 = vmatprep.subr.mxu0 0.0
        %1041 = vmatpush1.xpose.msra.mxu0 0.0
        %1042 = vmatprep.subr.mxu0 0.0
        %1043 = vmatpush1.xpose.msra.mxu0 0.0
        %1044 = vmatprep.subr.mxu0 0.0
        %1045 = vmatpush1.xpose.msra.mxu0 0.0
        %1046 = vmatprep.subr.mxu0 0.0
        %1047 = vmatpush1.xpose.msra.mxu0 0.0
        %1048 = vmatprep.subr.mxu0 0.0
        %1049 = vmatpush1.xpose.msra.mxu0 0.0
        %1050 = vmatprep.subr.mxu0 0.0
        %1051 = vmatpush1.xpose.msra.mxu0 0.0
        %1052 = vmatprep.subr.mxu0 0.0
        %1053 = vmatpush1.xpose.msra.mxu0 0.0
        %1054 = vmatprep.subr.mxu0 0.0
        %1055 = vmatpush1.xpose.msra.mxu0 0.0
        %1056 = vmatprep.subr.mxu0 0.0
        %1057 = vmatpush1.xpose.msra.mxu0 0.0
        %1058 = vmatprep.subr.mxu0 0.0
        %1059 = vmatpush1.xpose.msra.mxu0 0.0
        %1060 = vmatprep.subr.mxu0 0.0
        %1061 = vmatpush1.xpose.msra.mxu0 0.0
        %1062 = vmatprep.subr.mxu0 0.0
        %1063 = vmatpush1.xpose.msra.mxu0 0.0
        %1064 = vmatprep.subr.mxu0 0.0
        %1065 = vmatpush1.xpose.msra.mxu0 0.0
        %1066 = vmatprep.subr.mxu0 0.0
        %1067 = vmatpush1.xpose.msra.mxu0 0.0
        %1068 = vmatprep.subr.mxu0 0.0
        %1069 = vmatpush1.xpose.msra.mxu0 %v1036
        %1070 = vmatprep.subr.mxu0 0.0
        %1071 = vmatpush2.xpose.msra.mxu0 0.0
        %1072 = vmatprep.subr.mxu0 0.0
        %1073 = vmatpush2.xpose.msra.mxu0 0.0
        %1074 = vmatprep.subr.mxu0 0.0
        %1075 = vmatpush2.xpose.msra.mxu0 0.0
        %1076 = vmatprep.subr.mxu0 0.0
        %1077 = vmatpush2.xpose.msra.mxu0 0.0
        %1078 = vmatprep.subr.mxu0 0.0
        %1079 = vmatpush2.xpose.msra.mxu0 0.0
        %1080 = vmatprep.subr.mxu0 0.0
        %1081 = vmatpush2.xpose.msra.mxu0 0.0
        %1082 = vmatprep.subr.mxu0 0.0
        %1083 = vmatpush2.xpose.msra.mxu0 0.0
        %1084 = vmatprep.subr.mxu0 0.0
        %1085 = vmatpush2.xpose.msra.mxu0 0.0
        %1086 = vmatprep.subr.mxu0 0.0
        %1087 = vmatpush2.xpose.msra.mxu0 0.0
        %1088 = vmatprep.subr.mxu0 0.0
        %1089 = vmatpush2.xpose.msra.mxu0 0.0
        %1090 = vmatprep.subr.mxu0 0.0
        %1091 = vmatpush2.xpose.msra.mxu0 0.0
        %1092 = vmatprep.subr.mxu0 0.0
        %1093 = vmatpush2.xpose.msra.mxu0 0.0
        %1094 = vmatprep.subr.mxu0 0.0
        %1095 = vmatpush2.xpose.msra.mxu0 0.0
        %1096 = vmatprep.subr.mxu0 0.0
        %1097 = vmatpush2.xpose.msra.mxu0 0.0
        %1098 = vmatprep.subr.mxu0 0.0
        %1099 = vmatpush2.xpose.msra.mxu0 0.0
        %1100 = vmatprep.subr.mxu0 0.0
        %1101 = vmatpush2.xpose.msra.mxu0 0.0
        %1102 = vmatprep.mubr.f32.mxu0 0.0
        %1103 = vmatmul.mubr.f32.gmra.mxu0 %v1034
        %v1104 = vpop.f32.mrf.mxu0
        %v1105 = vadd.f32 0.0, %v1104
        %v1106 = vpop.f32.mrf.mxu0
        %1107 = vdwg.mxu0
        %v1108 = vsel %vm537, %v1105, -inf
        %1109 = vmax.xlane.f32.xlu0 %v1108
        %v1110 = vpop.xlane.xlu0 %1109
        %v1111 = vsub.f32 %v1105, %v1110
        %v1112 = vmul.f32 %v1111, 1.442695
        %v1113 = vpow.pop %v1112
        %v1114 = vsel %vm537, %v1113, 0.0
        %1115 = vadd.xlane.f32.xlu0 %v1114
        %v1116 = vpop.xlane.xlu0 %1115
        %1117 = vrot.lane.b32.xlu0 %v530, 40
        %v1118 = vpop.permute.xlu0 %1117
        %v1121 = vsel %vm537, %v1113, 0
        %1123 = vmatprep.subr.mxu0 0.0
        %1124 = vmatpush1.msra.mxu0 0.0
        %1125 = vmatprep.subr.mxu0 0.0
        %1126 = vmatpush1.msra.mxu0 0.0
        %1127 = vmatprep.subr.mxu0 0.0
        %1128 = vmatpush1.msra.mxu0 0.0
        %1129 = vmatprep.subr.mxu0 0.0
        %1130 = vmatpush1.msra.mxu0 0.0
        %1131 = vmatprep.subr.mxu0 0.0
        %1132 = vmatpush1.msra.mxu0 0.0
        %1133 = vmatprep.subr.mxu0 0.0
        %1134 = vmatpush1.msra.mxu0 0.0
        %1135 = vmatprep.subr.mxu0 0.0
        %1136 = vmatpush1.msra.mxu0 0.0
        %1137 = vmatprep.subr.mxu0 0.0
        %1138 = vmatpush1.msra.mxu0 0.0
        %1139 = vmatprep.subr.mxu0 0.0
        %1140 = vmatpush1.msra.mxu0 0.0
        %1141 = vmatprep.subr.mxu0 0.0
        %1142 = vmatpush1.msra.mxu0 0.0
        %1143 = vmatprep.subr.mxu0 0.0
        %1144 = vmatpush1.msra.mxu0 0.0
        %1145 = vmatprep.subr.mxu0 0.0
        %1146 = vmatpush1.msra.mxu0 0.0
        %1147 = vmatprep.subr.mxu0 0.0
        %1148 = vmatpush1.msra.mxu0 0.0
        %1149 = vmatprep.subr.mxu0 0.0
        %1150 = vmatpush1.msra.mxu0 0.0
        %1151 = vmatprep.subr.mxu0 0.0
        %1152 = vmatpush1.msra.mxu0 0.0
        %1153 = vmatprep.subr.mxu0 0.0
        %1154 = vmatpush1.msra.mxu0 %v1118
        %1155 = vmatprep.subr.mxu0 0.0
        %1156 = vmatpush2.msra.mxu0 0.0
        %1157 = vmatprep.subr.mxu0 0.0
        %1158 = vmatpush2.msra.mxu0 0.0
        %1159 = vmatprep.subr.mxu0 0.0
        %1160 = vmatpush2.msra.mxu0 0.0
        %1161 = vmatprep.subr.mxu0 0.0
        %1162 = vmatpush2.msra.mxu0 0.0
        %1163 = vmatprep.subr.mxu0 0.0
        %1164 = vmatpush2.msra.mxu0 0.0
        %1165 = vmatprep.subr.mxu0 0.0
        %1166 = vmatpush2.msra.mxu0 0.0
        %1167 = vmatprep.subr.mxu0 0.0
        %1168 = vmatpush2.msra.mxu0 0.0
        %1169 = vmatprep.subr.mxu0 0.0
        %1170 = vmatpush2.msra.mxu0 0.0
        %1171 = vmatprep.subr.mxu0 0.0
        %1172 = vmatpush2.msra.mxu0 0.0
        %1173 = vmatprep.subr.mxu0 0.0
        %1174 = vmatpush2.msra.mxu0 0.0
        %1175 = vmatprep.subr.mxu0 0.0
        %1176 = vmatpush2.msra.mxu0 0.0
        %1177 = vmatprep.subr.mxu0 0.0
        %1178 = vmatpush2.msra.mxu0 0.0
        %1179 = vmatprep.subr.mxu0 0.0
        %1180 = vmatpush2.msra.mxu0 0.0
        %1181 = vmatprep.subr.mxu0 0.0
        %1182 = vmatpush2.msra.mxu0 0.0
        %1183 = vmatprep.subr.mxu0 0.0
        %1184 = vmatpush2.msra.mxu0 0.0
        %1185 = vmatprep.subr.mxu0 0.0
        %1186 = vmatpush2.msra.mxu0 0.0
        %1187 = vmatprep.mubr.f32.mxu0 0.0
        %1188 = vmatmul.mubr.f32.gmra.mxu0 %v1121
        %v1189 = vpop.f32.mrf.mxu0
        %v1190 = vadd.f32 0.0, %v1189
        %v1191 = vpop.f32.mrf.mxu0
        %1192 = vdwg.mxu0
        %v1193 = vrcp.pop %v1116
        %v1194 = vmul.f32 %v1190, %v1193
        %1196 = vrot.lane.b32.xlu0 %v864, 8
        %v1197 = vpop.permute.xlu0 %1196
        %1200 = vrot.lane.b32.xlu0 %v1029, 16
        %v1201 = vpop.permute.xlu0 %1200
        %1204 = vrot.lane.b32.xlu0 %v1194, 24
        %v1205 = vpop.permute.xlu0 %1204
        %v1207 = vsel %vm537, %v699, %v1197
        %vm1208 = vcmask 130048
        %v1209 = vsel %vm1208, %v1207, %v1201
        %vm1210 = vcmask 195584
        %v1211 = vsel %vm1210, %v1209, %v1205
        %v1212 = vld [vmem:[%s2] sm:$0xff]
        %v1213 = vld [vmem:[%s2 + $0x8] sm:$0xff]
        %v1214 = vld [vmem:[%s2 + $0x10] sm:$0xff]
        %v1215 = vld [vmem:[%s2 + $0x18] sm:$0xff]
        %v1216 = vld [vmem:[%s3] sm:$0x1]
        %v1218 = vlaneseq
        %v1219 = vshrl.u32 %v1218, 7
        %v1220 = vsub.s32 0, %v1219
        %v1221 = vrot.slane %v1216, %v1220
        %v1224 = vsel %vm459, %v1211, 0
        %1226 = vmatprep.subr.mxu0 0.0
        %1227 = vmatpush1.msra.mxu0 0.0
        %1228 = vmatprep.subr.mxu0 0.0
        %1229 = vmatpush1.msra.mxu0 0.0
        %1230 = vmatprep.subr.mxu0 0.0
        %1231 = vmatpush1.msra.mxu0 0.0
        %1232 = vmatprep.subr.mxu0 0.0
        %1233 = vmatpush1.msra.mxu0 0.0
        %1234 = vmatprep.subr.mxu0 0.0
        %1235 = vmatpush1.msra.mxu0 0.0
        %1236 = vmatprep.subr.mxu0 0.0
        %1237 = vmatpush1.msra.mxu0 0.0
        %1238 = vmatprep.subr.mxu0 0.0
        %1239 = vmatpush1.msra.mxu0 0.0
        %1240 = vmatprep.subr.mxu0 0.0
        %1241 = vmatpush1.msra.mxu0 0.0
        %1242 = vmatprep.subr.mxu0 0.0
        %1243 = vmatpush1.msra.mxu0 0.0
        %1244 = vmatprep.subr.mxu0 0.0
        %1245 = vmatpush1.msra.mxu0 0.0
        %1246 = vmatprep.subr.mxu0 0.0
        %1247 = vmatpush1.msra.mxu0 0.0
        %1248 = vmatprep.subr.mxu0 0.0
        %1249 = vmatpush1.msra.mxu0 0.0
        %1250 = vmatprep.subr.mxu0 0.0
        %1251 = vmatpush1.msra.mxu0 %v1215
        %1252 = vmatprep.subr.mxu0 0.0
        %1253 = vmatpush1.msra.mxu0 %v1214
        %1254 = vmatprep.subr.mxu0 0.0
        %1255 = vmatpush1.msra.mxu0 %v1213
        %1256 = vmatprep.subr.mxu0 0.0
        %1257 = vmatpush1.msra.mxu0 %v1212
        %1258 = vmatprep.subr.mxu0 0.0
        %1259 = vmatpush2.msra.mxu0 0.0
        %1260 = vmatprep.subr.mxu0 0.0
        %1261 = vmatpush2.msra.mxu0 0.0
        %1262 = vmatprep.subr.mxu0 0.0
        %1263 = vmatpush2.msra.mxu0 0.0
        %1264 = vmatprep.subr.mxu0 0.0
        %1265 = vmatpush2.msra.mxu0 0.0
        %1266 = vmatprep.subr.mxu0 0.0
        %1267 = vmatpush2.msra.mxu0 0.0
        %1268 = vmatprep.subr.mxu0 0.0
        %1269 = vmatpush2.msra.mxu0 0.0
        %1270 = vmatprep.subr.mxu0 0.0
        %1271 = vmatpush2.msra.mxu0 0.0
        %1272 = vmatprep.subr.mxu0 0.0
        %1273 = vmatpush2.msra.mxu0 0.0
        %1274 = vmatprep.subr.mxu0 0.0
        %1275 = vmatpush2.msra.mxu0 0.0
        %1276 = vmatprep.subr.mxu0 0.0
        %1277 = vmatpush2.msra.mxu0 0.0
        %1278 = vmatprep.subr.mxu0 0.0
        %1279 = vmatpush2.msra.mxu0 0.0
        %1280 = vmatprep.subr.mxu0 0.0
        %1281 = vmatpush2.msra.mxu0 0.0
        %1282 = vmatprep.subr.mxu0 0.0
        %1283 = vmatpush2.msra.mxu0 0.0
        %1284 = vmatprep.subr.mxu0 0.0
        %1285 = vmatpush2.msra.mxu0 0.0
        %1286 = vmatprep.subr.mxu0 0.0
        %1287 = vmatpush2.msra.mxu0 0.0
        %1288 = vmatprep.subr.mxu0 0.0
        %1289 = vmatpush2.msra.mxu0 0.0
        %1290 = vmatprep.mubr.f32.mxu0 0.0
        %1291 = vmatmul.mubr.f32.gmra.mxu0 %v1224
        %v1292 = vpop.f32.mrf.mxu0
        %v1293 = vadd.f32 %v1221, %v1292
        %v1294 = vpop.f32.mrf.mxu0
        %1295 = vdwg.mxu0
        %v1296 = vld [vmem:[%s4] sm:$0x1]
        %v1297 = vld [vmem:[%s5] sm:$0x1]
        %v1298 = vsel %vm459, %v1293, 0.0
        %1299 = vadd.xlane.f32.xlu0 %v1298
        %v1300 = vpop.xlane.xlu0 %1299
        %v1301 = vrcp.pop 32.0
        %v1302 = vmul.f32 %v1300, %v1301
        %v1303 = vsub.f32 %v1293, %v1302
        %v1304 = vmul.f32 %v1303, %v1303
        %v1305 = vsel %vm459, %v1304, 0.0
        %1306 = vadd.xlane.f32.xlu0 %v1305
        %v1307 = vpop.xlane.xlu0 %1306
        %v1308 = vmul.f32 %v1307, %v1301
        %v1309 = vadd.f32 %v1308, 1e-05
        %v1310 = vrsqrt.pop %v1309
        %v1311 = vmul.f32 %v1303, %v1310
        %v1313 = vlaneseq
        %v1314 = vshrl.u32 %v1313, 7
        %v1315 = vsub.s32 0, %v1314
        %v1316 = vrot.slane %v1296, %v1315
        %v1318 = vmul.f32 %v1311, %v1316
        %v1320 = vlaneseq
        %v1321 = vshrl.u32 %v1320, 7
        %v1322 = vsub.s32 0, %v1321
        %v1323 = vrot.slane %v1297, %v1322
        %v1325 = vadd.f32 %v1318, %v1323
        %v1326 = vadd.f32 %v1325, %v454
        %v1327 = vld [vmem:[%s6] sm:$0xff]
        %v1328 = vld [vmem:[%s6 + $0x8] sm:$0xff]
        %v1329 = vld [vmem:[%s6 + $0x10] sm:$0xff]
        %v1330 = vld [vmem:[%s6 + $0x18] sm:$0xff]
        %v1331 = vld [vmem:[#allocation5] sm:$0x1]
        %v1333 = vlaneseq
        %v1334 = vshrl.u32 %v1333, 7
        %v1335 = vsub.s32 0, %v1334
        %v1336 = vrot.slane %v1331, %v1335
        %v1339 = vsel %vm459, %v1326, 0
        %1341 = vmatprep.subr.mxu0 0.0
        %1342 = vmatpush1.msra.mxu0 0.0
        %1343 = vmatprep.subr.mxu0 0.0
        %1344 = vmatpush1.msra.mxu0 0.0
        %1345 = vmatprep.subr.mxu0 0.0
        %1346 = vmatpush1.msra.mxu0 0.0
        %1347 = vmatprep.subr.mxu0 0.0
        %1348 = vmatpush1.msra.mxu0 0.0
        %1349 = vmatprep.subr.mxu0 0.0
        %1350 = vmatpush1.msra.mxu0 0.0
        %1351 = vmatprep.subr.mxu0 0.0
        %1352 = vmatpush1.msra.mxu0 0.0
        %1353 = vmatprep.subr.mxu0 0.0
        %1354 = vmatpush1.msra.mxu0 0.0
        %1355 = vmatprep.subr.mxu0 0.0
        %1356 = vmatpush1.msra.mxu0 0.0
        %1357 = vmatprep.subr.mxu0 0.0
        %1358 = vmatpush1.msra.mxu0 0.0
        %1359 = vmatprep.subr.mxu0 0.0
        %1360 = vmatpush1.msra.mxu0 0.0
        %1361 = vmatprep.subr.mxu0 0.0
        %1362 = vmatpush1.msra.mxu0 0.0
        %1363 = vmatprep.subr.mxu0 0.0
        %1364 = vmatpush1.msra.mxu0 0.0
        %1365 = vmatprep.subr.mxu0 0.0
        %1366 = vmatpush1.msra.mxu0 %v1330
        %1367 = vmatprep.subr.mxu0 0.0
        %1368 = vmatpush1.msra.mxu0 %v1329
        %1369 = vmatprep.subr.mxu0 0.0
        %1370 = vmatpush1.msra.mxu0 %v1328
        %1371 = vmatprep.subr.mxu0 0.0
        %1372 = vmatpush1.msra.mxu0 %v1327
        %1373 = vmatprep.subr.mxu0 0.0
        %1374 = vmatpush2.msra.mxu0 0.0
        %1375 = vmatprep.subr.mxu0 0.0
        %1376 = vmatpush2.msra.mxu0 0.0
        %1377 = vmatprep.subr.mxu0 0.0
        %1378 = vmatpush2.msra.mxu0 0.0
        %1379 = vmatprep.subr.mxu0 0.0
        %1380 = vmatpush2.msra.mxu0 0.0
        %1381 = vmatprep.subr.mxu0 0.0
        %1382 = vmatpush2.msra.mxu0 0.0
        %1383 = vmatprep.subr.mxu0 0.0
        %1384 = vmatpush2.msra.mxu0 0.0
        %1385 = vmatprep.subr.mxu0 0.0
        %1386 = vmatpush2.msra.mxu0 0.0
        %1387 = vmatprep.subr.mxu0 0.0
        %1388 = vmatpush2.msra.mxu0 0.0
        %1389 = vmatprep.subr.mxu0 0.0
        %1390 = vmatpush2.msra.mxu0 0.0
        %1391 = vmatprep.subr.mxu0 0.0
        %1392 = vmatpush2.msra.mxu0 0.0
        %1393 = vmatprep.subr.mxu0 0.0
        %1394 = vmatpush2.msra.mxu0 0.0
        %1395 = vmatprep.subr.mxu0 0.0
        %1396 = vmatpush2.msra.mxu0 0.0
        %1397 = vmatprep.subr.mxu0 0.0
        %1398 = vmatpush2.msra.mxu0 0.0
        %1399 = vmatprep.subr.mxu0 0.0
        %1400 = vmatpush2.msra.mxu0 0.0
        %1401 = vmatprep.subr.mxu0 0.0
        %1402 = vmatpush2.msra.mxu0 0.0
        %1403 = vmatprep.subr.mxu0 0.0
        %1404 = vmatpush2.msra.mxu0 0.0
        %1405 = vmatprep.mubr.f32.mxu0 0.0
        %1406 = vmatmul.mubr.f32.gmra.mxu0 %v1339
        %v1407 = vpop.f32.mrf.mxu0
        %v1408 = vadd.f32 %v1336, %v1407
        %v1409 = vpop.f32.mrf.mxu0
        %1410 = vdwg.mxu0
        %v1411 = vmax.f32 %v1408, 0.0
        %v1412 = vld [vmem:[%s8] sm:$0xff]
        %v1413 = vld [vmem:[%s8 + $0x8] sm:$0xff]
        %v1414 = vld [vmem:[%s8 + $0x10] sm:$0xff]
        %v1415 = vld [vmem:[%s8 + $0x18] sm:$0xff]
        %v1416 = vld [vmem:[%s8 + $0x20] sm:$0xff]
        %v1417 = vld [vmem:[%s8 + $0x28] sm:$0xff]
        %v1418 = vld [vmem:[%s8 + $0x30] sm:$0xff]
        %v1419 = vld [vmem:[%s8 + $0x38] sm:$0xff]
        %v1420 = vld [vmem:[#allocation7] sm:$0x1]
        %v1422 = vlaneseq
        %v1423 = vshrl.u32 %v1422, 7
        %v1424 = vsub.s32 0, %v1423
        %v1425 = vrot.slane %v1420, %v1424
        %vm1427 = vcmask 523264
        %v1429 = vsel %vm1427, %v1411, 0
        %1431 = vmatprep.subr.mxu0 0.0
        %1432 = vmatpush1.msra.mxu0 0.0
        %1433 = vmatprep.subr.mxu0 0.0
        %1434 = vmatpush1.msra.mxu0 0.0
        %1435 = vmatprep.subr.mxu0 0.0
        %1436 = vmatpush1.msra.mxu0 0.0
        %1437 = vmatprep.subr.mxu0 0.0
        %1438 = vmatpush1.msra.mxu0 0.0
        %1439 = vmatprep.subr.mxu0 0.0
        %1440 = vmatpush1.msra.mxu0 0.0
        %1441 = vmatprep.subr.mxu0 0.0
        %1442 = vmatpush1.msra.mxu0 0.0
        %1443 = vmatprep.subr.mxu0 0.0
        %1444 = vmatpush1.msra.mxu0 0.0
        %1445 = vmatprep.subr.mxu0 0.0
        %1446 = vmatpush1.msra.mxu0 0.0
        %1447 = vmatprep.subr.mxu0 0.0
        %1448 = vmatpush1.msra.mxu0 %v1419
        %1449 = vmatprep.subr.mxu0 0.0
        %1450 = vmatpush1.msra.mxu0 %v1418
        %1451 = vmatprep.subr.mxu0 0.0
        %1452 = vmatpush1.msra.mxu0 %v1417
        %1453 = vmatprep.subr.mxu0 0.0
        %1454 = vmatpush1.msra.mxu0 %v1416
        %1455 = vmatprep.subr.mxu0 0.0
        %1456 = vmatpush1.msra.mxu0 %v1415
        %1457 = vmatprep.subr.mxu0 0.0
        %1458 = vmatpush1.msra.mxu0 %v1414
        %1459 = vmatprep.subr.mxu0 0.0
        %1460 = vmatpush1.msra.mxu0 %v1413
        %1461 = vmatprep.subr.mxu0 0.0
        %1462 = vmatpush1.msra.mxu0 %v1412
        %1463 = vmatprep.subr.mxu0 0.0
        %1464 = vmatpush2.msra.mxu0 0.0
        %1465 = vmatprep.subr.mxu0 0.0
        %1466 = vmatpush2.msra.mxu0 0.0
        %1467 = vmatprep.subr.mxu0 0.0
        %1468 = vmatpush2.msra.mxu0 0.0
        %1469 = vmatprep.subr.mxu0 0.0
        %1470 = vmatpush2.msra.mxu0 0.0
        %1471 = vmatprep.subr.mxu0 0.0
        %1472 = vmatpush2.msra.mxu0 0.0
        %1473 = vmatprep.subr.mxu0 0.0
        %1474 = vmatpush2.msra.mxu0 0.0
        %1475 = vmatprep.subr.mxu0 0.0
        %1476 = vmatpush2.msra.mxu0 0.0
        %1477 = vmatprep.subr.mxu0 0.0
        %1478 = vmatpush2.msra.mxu0 0.0
        %1479 = vmatprep.subr.mxu0 0.0
        %1480 = vmatpush2.msra.mxu0 0.0
        %1481 = vmatprep.subr.mxu0 0.0
        %1482 = vmatpush2.msra.mxu0 0.0
        %1483 = vmatprep.subr.mxu0 0.0
        %1484 = vmatpush2.msra.mxu0 0.0
        %1485 = vmatprep.subr.mxu0 0.0
        %1486 = vmatpush2.msra.mxu0 0.0
        %1487 = vmatprep.subr.mxu0 0.0
        %1488 = vmatpush2.msra.mxu0 0.0
        %1489 = vmatprep.subr.mxu0 0.0
        %1490 = vmatpush2.msra.mxu0 0.0
        %1491 = vmatprep.subr.mxu0 0.0
        %1492 = vmatpush2.msra.mxu0 0.0
        %1493 = vmatprep.subr.mxu0 0.0
        %1494 = vmatpush2.msra.mxu0 0.0
        %1495 = vmatprep.mubr.f32.mxu0 0.0
        %1496 = vmatmul.mubr.f32.gmra.mxu0 %v1429
        %v1497 = vpop.f32.mrf.mxu0
        %v1498 = vadd.f32 %v1425, %v1497
        %v1499 = vpop.f32.mrf.mxu0
        %1500 = vdwg.mxu0
        %v1501 = vmax.f32 %v1498, 0.0
        %v1502 = vld [vmem:[%s10] sm:$0x1]
        %v1503 = vld [vmem:[%s11] sm:$0x1]
        %v1504 = vsel %vm459, %v1501, 0.0
        %1505 = vadd.xlane.f32.xlu0 %v1504
        %v1506 = vpop.xlane.xlu0 %1505
        %v1507 = vmul.f32 %v1506, %v1301
        %v1508 = vsub.f32 %v1501, %v1507
        %v1509 = vmul.f32 %v1508, %v1508
        %v1510 = vsel %vm459, %v1509, 0.0
        %1511 = vadd.xlane.f32.xlu0 %v1510
        %v1512 = vpop.xlane.xlu0 %1511
        %v1513 = vmul.f32 %v1512, %v1301
        %v1514 = vadd.f32 %v1513, 1e-05
        %v1515 = vrsqrt.pop %v1514
        %v1516 = vmul.f32 %v1508, %v1515
        %v1518 = vlaneseq
        %v1519 = vshrl.u32 %v1518, 7
        %v1520 = vsub.s32 0, %v1519
        %v1521 = vrot.slane %v1502, %v1520
        %v1523 = vmul.f32 %v1516, %v1521
        %v1525 = vlaneseq
        %v1526 = vshrl.u32 %v1525, 7
        %v1527 = vsub.s32 0, %v1526
        %v1528 = vrot.slane %v1503, %v1527
        %v1530 = vadd.f32 %v1523, %v1528
        %v1531 = vadd.f32 %v1530, %v1326
        %1532 = vst.msk [vmem:[%s453] sm:$0xff] %vm459, %v1531
        %s1533 = sand.u32 %s295, 1
        %s1534 = scalar_lea.sflag [#allocation4], %s1533
        %s1535 = sand.u32 %s295, 1
        %s1536 = smul.addr %s1535, 8
        %s1537 = scalar_lea.vmem [#allocation8], %s1536
        // Predicated region
        $region81: #{transformer_forward.1} parent=67 // pred_check
          %p1538 = pneg %p305
        $region82: #{transformer_forward.1} parent=67 // pred_check_branch
          %1540 = sbr.rel (%p1538) target = $region84
        $region83: #{transformer_forward.1} parent=67 // pred_region
          %s1542 = ssub.s32 128, 128
          %1543 = vsyncadd %s1534, %s1542
          %s1544 = smul.addr %s30, 128
          %s1545 = scalar_lea.hbm %s12, %s1544
          %s1547 = sshll.u32 %s1537, 4
          %s1548 = int_to_ptr.vmem [resolvable:$true] %s1547
          %1550 = dma.vmem_to_hbm [thread:$0]  %s1548, 128, %s1545, %s1534
        $region84: #{transformer_forward.1} parent=67 // pred_fallthru
          _
      $region68: #{transformer_forward.1} parent=5 // pred_fallthru
        _
      %p1551 = scmp.le.s32.totalorder 2, %s25
      // Predicated region
      $region85: #{transformer_forward.1} parent=5 // pred_check
        %p1552 = pneg %p1551
      $region86: #{transformer_forward.1} parent=5 // pred_check_branch
        %1554 = sbr.rel (%p1552) target = $region88
      $region87: #{transformer_forward.1} parent=5 // pred_region
        %s1555 = ssub.s32 %s25, 2
        // Predicated region
        $region89: #{transformer_forward.1} parent=87 // pred_check
          %p1556 = pneg %p311
        $region90: #{transformer_forward.1} parent=87 // pred_check_branch
          %1558 = sbr.rel (%p1556) target = $region92
        $region91: #{transformer_forward.1} parent=87 // pred_region
          %s1559 = sand.u32 %s296, 1
          %s1560 = scalar_lea.sflag [#allocation4], %s1559
          %s1561 = sand.u32 %s296, 1
          %s1562 = smul.addr %s1561, 8
          %s1563 = scalar_lea.vmem [#allocation8], %s1562
          %1564 = dma.done %s1560, 128
        $region92: #{transformer_forward.1} parent=87 // pred_fallthru
          _
      $region88: #{transformer_forward.1} parent=5 // pred_fallthru
        _
    $region6: #{transformer_forward.1} parent=1 // loop_footer
      %s29 = sadd.s32 1, %s25
    $region7: #{transformer_forward.1} parent=1 // loop_footer_branch
      %24 = sbr.rel target = $region3
    $region8: #{transformer_forward.1} parent=1 // loop_exit
      _
    %1565 = vsyncpa [#allocation3], 1
    %s1566 = scalar_lea.sflag [#allocation3], 1
    %1567 = vsyncpa %s1566, 1
    %1568 = vsyncpa [#allocation6], 1
    %1569 = vsyncpa [#allocation4], 1
    %s1570 = scalar_lea.sflag [#allocation4], 1
    %1571 = vsyncpa %s1570, 1

</llo_original>
